<compile_context>
chip_gen: v7x
topology: tpu7x:2x2x1
jax: 0.10.0
libtpu: 0.0.40
codegen_flags: <defaults>
</compile_context>

<pallas_src>
import functools

import jax
import jax.numpy as jnp
from jax.experimental import pallas as pl
from jax.experimental.pallas import tpu as pltpu


def _round_up(a, b):
    return (a + b - 1) // b * b


# ----------------------------------------------------------------------------
# Fused PreNorm + Linear kernel: out = LayerNorm(x) @ W + b
# ----------------------------------------------------------------------------
def _prenorm_linear_kernel(x_ref, g_ref, bta_ref, w_ref, b_ref, o_ref,
                           mean_ref, inv_ref, xn_ref, acc_ref, *, eps, tk):
    j = pl.program_id(1)
    k = pl.program_id(2)

    # Zero the f32 accumulator at the start of every reduction pass.
    @pl.when(k == 0)
    def _():
        acc_ref[...] = jnp.zeros_like(acc_ref)

    # LayerNorm statistics over the FULL feature dim, once per ROW block
    # (j == 0, k == 0).  One pass: var = E[x^2] - mean^2 (eps dominates any
    # tiny negative from cancellation).
    @pl.when(jnp.logical_and(j == 0, k == 0))
    def _():
        x = x_ref[...].astype(jnp.float32)                        # (tm, D)
        inv_d = 1.0 / x.shape[-1]
        mean = jnp.sum(x, axis=-1, keepdims=True) * inv_d         # (tm, 1)
        mean_sq = jnp.sum(x * x, axis=-1, keepdims=True) * inv_d  # (tm, 1)
        var = mean_sq - mean * mean                               # biased, like torch
        mean_ref[...] = mean
        inv_ref[...] = jax.lax.rsqrt(var + eps)

    off = pl.multiple_of(k * tk, 128)

    # Normalize each K-slice exactly once per row block (j == 0) and cache it in
    # VMEM, already cast to the MXU feed dtype.  For j > 0 the MXU streams
    # straight out of this cache: no repeated XLU/VPU work per output-column tile.
    @pl.when(j == 0)
    def _():
        xk = x_ref[:, pl.ds(off, tk)].astype(jnp.float32)         # (tm, tk)
        gk = g_ref[:, pl.ds(off, tk)]                             # (1, tk)  resident
        bk = bta_ref[:, pl.ds(off, tk)]                           # (1, tk)  resident
        xn = (xk - mean_ref[...]) * inv_ref[...] * gk + bk
        xn_ref[:, pl.ds(off, tk)] = xn.astype(xn_ref.dtype)

    acc_ref[...] += jnp.dot(xn_ref[:, pl.ds(off, tk)], w_ref[...],
                            preferred_element_type=jnp.float32)

    @pl.when(k == pl.num_programs(2) - 1)
    def _():
        o_ref[...] = (acc_ref[...] + b_ref[...].astype(jnp.float32)).astype(o_ref.dtype)


def pre_norm_linear(x, gamma, beta, w, bias, *, eps=1e-5,
                    tm=256, tn=256, tk=512,
                    mxu_dtype=jnp.bfloat16, vmem_limit_mb=48):
    """Fused fn(LayerNorm(x)) with fn = Linear(D -> H).

    x: (B, N, D); gamma, beta: (D,); w: (D, H); bias: (H,).  Returns (B, N, H).
    D must be a multiple of 128 (lane-dense).  M and H may be ragged: partial
    row/column blocks are handled by Pallas' masked boundary blocks (no jnp.pad
    HBM copies).  `mxu_dtype` (default bf16) is the MXU feed dtype; pass
    jnp.float32 (or None) for a full-f32 matmul.  On v6e/v7x keep tn a multiple
    of 256 (2x256x256 MXU); 128-multiples are fine on v5e.
    """
    B, N, D = x.shape
    Dw, H = w.shape
    assert Dw == D and gamma.shape == (D,) and beta.shape == (D,) and bias.shape == (H,)
    assert D % 128 == 0, "pad the feature dim to a multiple of 128 in the caller"
    M = B * N
    x2d = x.reshape(M, D)

    if mxu_dtype is None:
        mxu_dtype = w.dtype
    # Callers should store weights in mxu_dtype to avoid this one-time cast copy.
    wq = w if w.dtype == mxu_dtype else w.astype(mxu_dtype)

    # --- tile sizes, lane/sublane aligned, clamped for small shapes ------------
    tm = _round_up(max(8, min(tm, _round_up(M, 8))), 8)
    tn = _round_up(min(tn, _round_up(H, 128)), 128)
    tk = min(tk, D)
    for cand in (tk, 512, 384, 256, 128):
        if cand <= D and cand % 128 == 0 and D % cand == 0:
            tk = cand
            break

    # --- VMEM budget: shrink the row tile until the working set fits -----------
    # (v7x has only 64 MiB VMEM; v5e/v6e have 128 MiB and keep the larger tm.)
    mxu_bytes = jnp.dtype(mxu_dtype).itemsize
    out_bytes = jnp.dtype(x.dtype).itemsize

    def _vmem_est(tm_):
        return (2 * tm_ * D * 4            # x row block (f32), double-buffered
                + tm_ * D * mxu_bytes      # normalized-x cache
                + tm_ * tn * 4             # f32 accumulator
                + 2 * tk * tn * mxu_bytes  # weight tile, double-buffered
                + 2 * tm_ * tn * out_bytes # output tile, double-buffered
                + 4 * D * 4 + 4 * tn * 4)  # gamma/beta/linear-bias

    budget = int((vmem_limit_mb << 20) * 0.9)
    while tm > 8 and _vmem_est(tm) > budget:
        tm = max(8, _round_up(tm // 2, 8))
    # TODO(synk): optionally single-buffer the x input (pipeline_mode=pl.Buffered(1))
    # on v7x since its block index never changes within a row block.

    # Hoist parameter casts/reshapes out of the kernel (done once, not per tile).
    g2 = gamma.reshape(1, D).astype(jnp.float32)
    b2 = beta.reshape(1, D).astype(jnp.float32)
    lb = bias.reshape(1, H)

    grid = (pl.cdiv(M, tm), pl.cdiv(H, tn), D // tk)   # (rows, out-cols, reduction)
    out = pl.pallas_call(
        functools.partial(_prenorm_linear_kernel, eps=eps, tk=tk),
        out_shape=jax.ShapeDtypeStruct((M, H), x.dtype),
        grid=grid,
        in_specs=[
            pl.BlockSpec((tm, D), lambda i, j, k: (i, 0)),   # x rows, full D (resident over j, k)
            pl.BlockSpec((1, D), lambda i, j, k: (0, 0)),    # gamma, resident
            pl.BlockSpec((1, D), lambda i, j, k: (0, 0)),    # beta, resident
            pl.BlockSpec((tk, tn), lambda i, j, k: (k, j)),  # weight tile (streamed)
            pl.BlockSpec((1, tn), lambda i, j, k: (0, j)),   # linear bias tile
        ],
        out_specs=pl.BlockSpec((tm, tn), lambda i, j, k: (i, j)),
        scratch_shapes=[
            pltpu.VMEM((tm, 1), jnp.float32),     # cached mean
            pltpu.VMEM((tm, 1), jnp.float32),     # cached rsqrt(var + eps)
            pltpu.VMEM((tm, D), mxu_dtype),       # cached normalized x (MXU feed)
            pltpu.VMEM((tm, tn), jnp.float32),    # matmul accumulator
        ],
        compiler_params=pltpu.CompilerParams(
            # j MUST be "arbitrary": the normalized-x cache is filled at j == 0,
            # so the j axis cannot be sharded across cores.
            dimension_semantics=("parallel", "arbitrary", "arbitrary"),
            vmem_limit_bytes=vmem_limit_mb << 20,
        ),
    )(x2d, g2, b2, wq, lb)
    return out.reshape(B, N, H)


# ----------------------------------------------------------------------------
# Standalone LayerNorm kernel (for PreNorm with an arbitrary fn)
# ----------------------------------------------------------------------------
def _layernorm_kernel(x_ref, g_ref, b_ref, o_ref, *, eps):
    x = x_ref[...].astype(jnp.float32)                        # (tm, D)
    inv_d = 1.0 / x.shape[-1]
    mean = jnp.sum(x, axis=-1, keepdims=True) * inv_d
    mean_sq = jnp.sum(x * x, axis=-1, keepdims=True) * inv_d
    var = mean_sq - mean * mean                               # biased, like torch
    y = (x - mean) * jax.lax.rsqrt(var + eps) * g_ref[...] + b_ref[...]
    o_ref[...] = y.astype(o_ref.dtype)


def layer_norm_pallas(x2d, gamma, beta, *, eps=1e-5, tm=512, out_dtype=None,
                      vmem_limit_mb=48):
    """x2d: (M, D); gamma, beta: (D,). Returns (M, D) in `out_dtype` (default x dtype).

    D must be a multiple of 128.  Purely HBM-bound: large row tiles (default 512)
    amortize per-step overhead; set out_dtype=jnp.bfloat16 to halve write traffic
    when the downstream fn accepts bf16.
    """
    M, D = x2d.shape
    assert D % 128 == 0, "pad the feature dim to a multiple of 128 in the caller"
    out_dtype = x2d.dtype if out_dtype is None else out_dtype
    tm = _round_up(max(8, min(tm, _round_up(M, 8))), 8)

    in_b = jnp.dtype(x2d.dtype).itemsize
    out_b = jnp.dtype(out_dtype).itemsize
    budget = int((vmem_limit_mb << 20) * 0.9)
    while tm > 8 and 2 * tm * D * (in_b + out_b) + 8 * D * 4 > budget:
        tm = max(8, _round_up(tm // 2, 8))

    g2 = gamma.reshape(1, D).astype(jnp.float32)
    b2 = beta.reshape(1, D).astype(jnp.float32)
    out = pl.pallas_call(
        functools.partial(_layernorm_kernel, eps=eps),
        out_shape=jax.ShapeDtypeStruct((M, D), out_dtype),
        grid=(pl.cdiv(M, tm),),
        in_specs=[
            pl.BlockSpec((tm, D), lambda i: (i, 0)),
            pl.BlockSpec((1, D), lambda i: (0, 0)),
            pl.BlockSpec((1, D), lambda i: (0, 0)),
        ],
        out_specs=pl.BlockSpec((tm, D), lambda i: (i, 0)),
        compiler_params=pltpu.CompilerParams(
            dimension_semantics=("parallel",),
            vmem_limit_bytes=vmem_limit_mb << 20,
        ),
    )(x2d, g2, b2)
    return out


def pre_norm(x, gamma, beta, fn, *, eps=1e-5, norm_dtype=None, **kwargs):
    """Generic PreNorm: fn(LayerNorm(x), **kwargs), x: (B, N, D), arbitrary fn."""
    B, N, D = x.shape
    normed = layer_norm_pallas(x.reshape(B * N, D), gamma, beta,
                               eps=eps, out_dtype=norm_dtype).reshape(B, N, D)
    return fn(normed, **kwargs)


if __name__ == "__main__":
    key = jax.random.PRNGKey(0)
    # Small shapes: batch=2, seq=100 (ragged -> exercises masked partial row
    # blocks), model dim D=512, wrapped-fn hidden H=640 (ragged -> exercises
    # partial output-column blocks).
    B, N, D, H = 2, 100, 512, 640

    k_x, k_g, k_bt, k_w, k_b = jax.random.split(key, 5)
    x = jax.random.normal(k_x, (B, N, D), dtype=jnp.float32)

    # PreNorm's LayerNorm affine parameters (non-trivial, to exercise the affine path).
    gamma = 1.0 + 0.1 * jax.random.normal(k_g, (D,), dtype=jnp.float32)
    beta = 0.1 * jax.random.normal(k_bt, (D,), dtype=jnp.float32)

    # Parameters of the wrapped fn (Linear D -> H).
    w = 0.02 * jax.random.normal(k_w, (D, H), dtype=jnp.float32)
    b = 0.02 * jax.random.normal(k_b, (H,), dtype=jnp.float32)

    # Fused PreNorm(Linear) path, bf16 MXU feed.  Small tiles here so the demo
    # exercises a real multi-step (i, j, k) grid with partial boundary blocks;
    # production defaults are tm=256, tn=256, tk<=512 (tn multiples of 256 on
    # v6e/v7x).
    out = pre_norm_linear(x, gamma, beta, w, b, tm=128, tn=256, tk=256)
    out = jax.block_until_ready(out)

    # Generic PreNorm path (standalone LayerNorm kernel + arbitrary fn), full f32.
    out2 = pre_norm(x, gamma, beta, lambda z: jnp.einsum("bnd,dh->bnh", z, w) + b)
    out2 = jax.block_until_ready(out2)

    # Pure-JAX reference.
    mean = jnp.mean(x, axis=-1, keepdims=True)
    var = jnp.mean((x - mean) ** 2, axis=-1, keepdims=True)
    ref_norm = (x - mean) * jax.lax.rsqrt(var + 1e-5) * gamma + beta
    ref = jnp.einsum("bnd,dh->bnh", ref_norm, w) + b

    assert out.shape == (B, N, H)
    assert out2.shape == (B, N, H)
    # bf16 MXU feed -> looser tolerance against the f32 reference.
    assert jnp.allclose(out, ref, atol=2e-2, rtol=2e-2), float(jnp.max(jnp.abs(out - ref)))
    # Generic path is full f32 -> tight tolerance.
    assert jnp.allclose(out2, ref, atol=2e-3, rtol=2e-3), float(jnp.max(jnp.abs(out2 - ref)))
    print("KERNEL_OK")
</pallas_src>

<mosaic_0001>
module attributes {stable_mosaic.version = 11 : i64} {
  func.func @_prenorm_linear_kernel(%arg0: i32, %arg1: i32, %arg2: i32, %arg3: memref<128x512xf32, #tpu.memory_space<vmem>>, %arg4: memref<1x512xf32, #tpu.memory_space<vmem>>, %arg5: memref<1x512xf32, #tpu.memory_space<vmem>>, %arg6: memref<256x256xbf16, #tpu.memory_space<vmem>>, %arg7: memref<1x256xf32, #tpu.memory_space<vmem>>, %arg8: memref<128x256xf32, #tpu.memory_space<vmem>>, %arg9: memref<128x1xf32, #tpu.memory_space<vmem>>, %arg10: memref<128x1xf32, #tpu.memory_space<vmem>>, %arg11: memref<128x512xbf16, #tpu.memory_space<vmem>>, %arg12: memref<128x256xf32, #tpu.memory_space<vmem>>) attributes {dimension_semantics = [#tpu.dimension_semantics<parallel>, #tpu.dimension_semantics<arbitrary>, #tpu.dimension_semantics<arbitrary>], iteration_bounds = array<i64: 2, 3, 2>, scalar_prefetch = 0 : i64, scratch_operands = 4 : i64, tpu.core_type = #tpu.core_type<tc>, window_params = [{transform_indices = @transform_0, window_bounds = array<i64: 128, 512>}, {pipeline_mode = #tpu.pipeline_mode<synchronous>, transform_indices = @transform_1, window_bounds = array<i64: 1, 512>}, {pipeline_mode = #tpu.pipeline_mode<synchronous>, transform_indices = @transform_2, window_bounds = array<i64: 1, 512>}, {transform_indices = @transform_3, window_bounds = array<i64: 256, 256>}, {transform_indices = @transform_4, window_bounds = array<i64: 1, 256>}, {transform_indices = @transform_5, window_bounds = array<i64: 128, 256>}]} {
    %c0_i32 = arith.constant 0 : i32
    %0 = arith.cmpi eq, %arg2, %c0_i32 : i32
    %1 = arith.extui %0 : i1 to i32
    %c0_i32_0 = arith.constant 0 : i32
    %2 = arith.cmpi ne, %1, %c0_i32_0 : i32
    scf.if %2 {
      %cst_13 = arith.constant 0.000000e+00 : f32
      %23 = vector.broadcast %cst_13 : f32 to vector<128x256xf32>
      %c0_14 = arith.constant 0 : index
      %c0_15 = arith.constant 0 : index
      %24 = vector.load %arg12[%c0_14, %c0_15] : memref<128x256xf32, #tpu.memory_space<vmem>>, vector<128x256xf32>
      tpu.vector_store %arg12[%c0_14, %c0_15], %23 {strides = array<i32>} : memref<128x256xf32, #tpu.memory_space<vmem>>, vector<128x256xf32>,
    } else {
    }
    %c0_i32_1 = arith.constant 0 : i32
    %3 = arith.cmpi eq, %arg1, %c0_i32_1 : i32
    %c0_i32_2 = arith.constant 0 : i32
    %4 = arith.cmpi eq, %arg2, %c0_i32_2 : i32
    %5 = arith.andi %3, %4 : i1
    %6 = arith.extui %5 : i1 to i32
    %c0_i32_3 = arith.constant 0 : i32
    %7 = arith.cmpi ne, %6, %c0_i32_3 : i32
    scf.if %7 {
      %c0_13 = arith.constant 0 : index
      %c0_14 = arith.constant 0 : index
      %23 = vector.load %arg3[%c0_13, %c0_14] : memref<128x512xf32, #tpu.memory_space<vmem>>, vector<128x512xf32>
      %cst_15 = arith.constant dense<0.000000e+00> : vector<128xf32>
      %24 = vector.multi_reduction <add>, %23, %cst_15 [1] : vector<128x512xf32> to vector<128xf32>
      %25 = vector.shape_cast %24 : vector<128xf32> to vector<128x1xf32>
      %cst_16 = arith.constant 0.001953125 : f32
      %26 = vector.broadcast %cst_16 : f32 to vector<128x1xf32>
      %27 = arith.mulf %25, %26 : vector<128x1xf32>
      %28 = arith.mulf %23, %23 : vector<128x512xf32>
      %cst_17 = arith.constant dense<0.000000e+00> : vector<128xf32>
      %29 = vector.multi_reduction <add>, %28, %cst_17 [1] : vector<128x512xf32> to vector<128xf32>
      %30 = vector.shape_cast %29 : vector<128xf32> to vector<128x1xf32>
      %cst_18 = arith.constant 0.001953125 : f32
      %31 = vector.broadcast %cst_18 : f32 to vector<128x1xf32>
      %32 = arith.mulf %30, %31 : vector<128x1xf32>
      %33 = arith.mulf %27, %27 : vector<128x1xf32>
      %34 = arith.subf %32, %33 : vector<128x1xf32>
      %c0_19 = arith.constant 0 : index
      %c0_20 = arith.constant 0 : index
      %35 = vector.load %arg9[%c0_19, %c0_20] : memref<128x1xf32, #tpu.memory_space<vmem>>, vector<128x1xf32>
      tpu.vector_store %arg9[%c0_19, %c0_20], %27 {strides = array<i32>} : memref<128x1xf32, #tpu.memory_space<vmem>>, vector<128x1xf32>,
      %cst_21 = arith.constant 9.99999974E-6 : f32
      %36 = vector.broadcast %cst_21 : f32 to vector<128x1xf32>
      %37 = arith.addf %34, %36 : vector<128x1xf32>
      %38 = math.rsqrt %37 : vector<128x1xf32>
      %c0_22 = arith.constant 0 : index
      %c0_23 = arith.constant 0 : index
      %39 = vector.load %arg10[%c0_22, %c0_23] : memref<128x1xf32, #tpu.memory_space<vmem>>, vector<128x1xf32>
      tpu.vector_store %arg10[%c0_22, %c0_23], %38 {strides = array<i32>} : memref<128x1xf32, #tpu.memory_space<vmem>>, vector<128x1xf32>,
    } else {
    }
    %c256_i32 = arith.constant 256 : i32
    %8 = arith.muli %arg2, %c256_i32 : i32
    %9 = tpu.assume_multiple %8, 128 : i32
    %c0_i32_4 = arith.constant 0 : i32
    %10 = arith.cmpi eq, %arg1, %c0_i32_4 : i32
    %11 = arith.extui %10 : i1 to i32
    %c0_i32_5 = arith.constant 0 : i32
    %12 = arith.cmpi ne, %11, %c0_i32_5 : i32
    scf.if %12 {
      %c0_13 = arith.constant 0 : index
      %23 = arith.index_cast %9 : i32 to index
      %24 = vector.load %arg3[%c0_13, %23] : memref<128x512xf32, #tpu.memory_space<vmem>>, vector<128x256xf32>
      %c0_14 = arith.constant 0 : index
      %25 = arith.index_cast %9 : i32 to index
      %26 = vector.load %arg4[%c0_14, %25] : memref<1x512xf32, #tpu.memory_space<vmem>>, vector<1x256xf32>
      %c0_15 = arith.constant 0 : index
      %27 = arith.index_cast %9 : i32 to index
      %28 = vector.load %arg5[%c0_15, %27] : memref<1x512xf32, #tpu.memory_space<vmem>>, vector<1x256xf32>
      %c0_16 = arith.constant 0 : index
      %c0_17 = arith.constant 0 : index
      %29 = vector.load %arg9[%c0_16, %c0_17] : memref<128x1xf32, #tpu.memory_space<vmem>>, vector<128x1xf32>
      %30 = vector.broadcast %29 : vector<128x1xf32> to vector<128x256xf32>
      %31 = arith.subf %24, %30 : vector<128x256xf32>
      %c0_18 = arith.constant 0 : index
      %c0_19 = arith.constant 0 : index
      %32 = vector.load %arg10[%c0_18, %c0_19] : memref<128x1xf32, #tpu.memory_space<vmem>>, vector<128x1xf32>
      %33 = vector.broadcast %32 : vector<128x1xf32> to vector<128x256xf32>
      %34 = arith.mulf %31, %33 : vector<128x256xf32>
      %35 = vector.broadcast %26 : vector<1x256xf32> to vector<128x256xf32>
      %36 = arith.mulf %34, %35 : vector<128x256xf32>
      %37 = vector.broadcast %28 : vector<1x256xf32> to vector<128x256xf32>
      %38 = arith.addf %36, %37 : vector<128x256xf32>
      %39 = arith.truncf %38 : vector<128x256xf32> to vector<128x256xbf16>
      %c0_20 = arith.constant 0 : index
      %40 = arith.index_cast %9 : i32 to index
      %41 = vector.load %arg11[%c0_20, %40] : memref<128x512xbf16, #tpu.memory_space<vmem>>, vector<128x256xbf16>
      tpu.vector_store %arg11[%c0_20, %40], %39 {strides = array<i32>} : memref<128x512xbf16, #tpu.memory_space<vmem>>, vector<128x256xbf16>,
    } else {
    }
    %c0 = arith.constant 0 : index
    %c0_6 = arith.constant 0 : index
    %13 = vector.load %arg12[%c0, %c0_6] : memref<128x256xf32, #tpu.memory_space<vmem>>, vector<128x256xf32>
    %c0_7 = arith.constant 0 : index
    %14 = arith.index_cast %9 : i32 to index
    %15 = vector.load %arg11[%c0_7, %14] : memref<128x512xbf16, #tpu.memory_space<vmem>>, vector<128x256xbf16>
    %c0_8 = arith.constant 0 : index
    %c0_9 = arith.constant 0 : index
    %16 = vector.load %arg6[%c0_8, %c0_9] : memref<256x256xbf16, #tpu.memory_space<vmem>>, vector<256x256xbf16>
    %cst = arith.constant dense<0.000000e+00> : vector<128x256xf32>
    %17 = tpu.matmul %15, %16, %cst {dimension_numbers = #tpu.dot_dimension_numbers<[1], [0], [0], [1], [0, 0, 1, 1], [], []>} : vector<128x256xbf16>, vector<256x256xbf16>, vector<128x256xf32> -> vector<128x256xf32>
    %18 = arith.addf %13, %17 : vector<128x256xf32>
    %c0_10 = arith.constant 0 : index
    %c0_11 = arith.constant 0 : index
    %19 = vector.load %arg12[%c0_10, %c0_11] : memref<128x256xf32, #tpu.memory_space<vmem>>, vector<128x256xf32>
    tpu.vector_store %arg12[%c0_10, %c0_11], %18 {strides = array<i32>} : memref<128x256xf32, #tpu.memory_space<vmem>>, vector<128x256xf32>,
    %c1_i32 = arith.constant 1 : i32
    %20 = arith.cmpi eq, %arg2, %c1_i32 : i32
    %21 = arith.extui %20 : i1 to i32
    %c0_i32_12 = arith.constant 0 : i32
    %22 = arith.cmpi ne, %21, %c0_i32_12 : i32
    scf.if %22 {
      %c0_13 = arith.constant 0 : index
      %c0_14 = arith.constant 0 : index
      %23 = vector.load %arg12[%c0_13, %c0_14] : memref<128x256xf32, #tpu.memory_space<vmem>>, vector<128x256xf32>
      %c0_15 = arith.constant 0 : index
      %c0_16 = arith.constant 0 : index
      %24 = vector.load %arg7[%c0_15, %c0_16] : memref<1x256xf32, #tpu.memory_space<vmem>>, vector<1x256xf32>
      %25 = vector.broadcast %24 : vector<1x256xf32> to vector<128x256xf32>
      %26 = arith.addf %23, %25 : vector<128x256xf32>
      %c0_17 = arith.constant 0 : index
      %c0_18 = arith.constant 0 : index
      %27 = vector.load %arg8[%c0_17, %c0_18] : memref<128x256xf32, #tpu.memory_space<vmem>>, vector<128x256xf32>
      tpu.vector_store %arg8[%c0_17, %c0_18], %26 {strides = array<i32>} : memref<128x256xf32, #tpu.memory_space<vmem>>, vector<128x256xf32>,
    } else {
    }
    return
  }
  func.func @transform_0(%arg0: i32, %arg1: i32, %arg2: i32) -> (i32, i32) {
    %c0_i32 = arith.constant 0 : i32
    %c0_i32_0 = arith.constant 0 : i32
    return %arg0, %c0_i32 : i32, i32
  }
  func.func @transform_1(%arg0: i32, %arg1: i32, %arg2: i32) -> (i32, i32) {
    %c0_i32 = arith.constant 0 : i32
    %c0_i32_0 = arith.constant 0 : i32
    %c0_i32_1 = arith.constant 0 : i32
    return %c0_i32, %c0_i32_0 : i32, i32
  }
  func.func @transform_2(%arg0: i32, %arg1: i32, %arg2: i32) -> (i32, i32) {
    %c0_i32 = arith.constant 0 : i32
    %c0_i32_0 = arith.constant 0 : i32
    %c0_i32_1 = arith.constant 0 : i32
    return %c0_i32, %c0_i32_0 : i32, i32
  }
  func.func @transform_3(%arg0: i32, %arg1: i32, %arg2: i32) -> (i32, i32) {
    %c0_i32 = arith.constant 0 : i32
    return %arg2, %arg1 : i32, i32
  }
  func.func @transform_4(%arg0: i32, %arg1: i32, %arg2: i32) -> (i32, i32) {
    %c0_i32 = arith.constant 0 : i32
    %c0_i32_0 = arith.constant 0 : i32
    return %c0_i32, %arg1 : i32, i32
  }
  func.func @transform_5(%arg0: i32, %arg1: i32, %arg2: i32) -> (i32, i32) {
    %c0_i32 = arith.constant 0 : i32
    return %arg0, %arg1 : i32, i32
  }
}

</mosaic_0001>

<llo_original>
// kernel: tpu_custom_call.1
$region0: #{tpu_custom_call.1}
  #allocation0 [shape = 'u32[]', space=smem, size = 0x4, offset = 0x4, fixed_abs, tag = 'smem constant byte address 0x4 - core index']
  #allocation1 [shape = 'u32[144,128]{1,0:T(1,128)}', space=vmem, size = 0x12000, scoped, tag = 'internal scratch']
  #allocation2 [shape = 'f32[128,1]{1,0:T(8,128)}', space=vmem, size = 0x10000, scoped, tag = 'scratch operand']
  #allocation3 [shape = 'f32[128,1]{1,0:T(8,128)}', space=vmem, size = 0x10000, scoped, tag = 'scratch operand']
  #allocation4 [shape = 'bf16[128,512]{1,0:T(16,128)(2,1)}', space=vmem, size = 0x20000, scoped, tag = 'scratch operand']
  #allocation5 [shape = 'f32[128,256]{1,0:T(8,128)}', space=vmem, size = 0x20000, scoped, tag = 'scratch operand']
  %s0 = inlined_call_operand.hbm [shape: f32[200,512], index: 0, kind: input, shape index: {}]
  %s1 = inlined_call_operand.hbm [shape: f32[1,512], index: 1, kind: input, shape index: {}]
  %s2 = inlined_call_operand.vmem [shape: f32[1,512], index: 2, kind: input, shape index: {}]
  %s3 = inlined_call_operand.hbm [shape: bf16[512,640], index: 3, kind: input, shape index: {}]
  %s4 = inlined_call_operand.vmem [shape: f32[1,640], index: 4, kind: input, shape index: {}]
  %s5 = inlined_call_operand.hbm [shape: f32[200,640], index: 5, kind: output, shape index: {}]
  %s6 = sld [smem:[#allocation0]]
  $region81: #{tpu_custom_call.1} parent=0
    _
  %s8 = ssub.s32 1, %s6
  %s9 = scalar_select 0, %s8, %s6
  $region1: #{tpu_custom_call.1} parent=0
    #allocation6 [shape = 'u8[524288]{0}', space=vmem, size = 0x80000, scoped, tag = 'input window, operand 0']
    #allocation7 [shape = 's32[2]{0}', space=sflag, size = 0x8, scoped, tag = 'scoped memory for tpu_custom_call.1']
    #allocation8 [shape = 's32[2]{0}', space=sflag, size = 0x8, scoped, tag = 'scoped memory for tpu_custom_call.1']
    #allocation9 [shape = 'u8[2048]{0}', space=vmem, size = 0x800, scoped, tag = 'input window, operand 1, single buffered']
    #allocation10 [shape = 's32[1]{0}', space=sflag, size = 0x4, scoped, tag = 'scoped memory for tpu_custom_call.1']
    #allocation11 [shape = 'u8[262144]{0}', space=vmem, size = 0x40000, scoped, tag = 'input window, operand 3']
    #allocation12 [shape = 'u8[262144]{0}', space=vmem, size = 0x40000, scoped, tag = 'output window, operand 0']
    %10 = vsyncpa [#allocation7], 0
    %s11 = scalar_lea.sflag [#allocation7], 1
    %12 = vsyncpa %s11, 0
    %13 = vsyncpa [#allocation10], 0
    %14 = vsyncpa [#allocation8], 0
    %s15 = scalar_lea.sflag [#allocation8], 1
    %16 = vsyncpa %s15, 0
    loop: start=0, step=1, limit=14
    $region2: #{tpu_custom_call.1} parent=1 // loop_pre_header
      _
    $region3: #{tpu_custom_call.1} parent=1 // loop_header
      %s18 = sphi 0, %s22
      %p19 = scmp.ge.s32.totalorder %s18, 14
      %s25 = sphi 0, %s44
      %s26 = sphi 0, %s40
      %s27 = sphi 0, %s36
      %s28 = sphi 0, %s25
      %s29 = sphi 0, %s26
      %s30 = sphi 0, %s27
      %s31 = sphi 0, %s28
      %s32 = sphi 0, %s29
      %s33 = sphi 0, %s30
      %s47 = sphi 0, %s49
      %s50 = sphi 0, %s47
      %s51 = sphi 0, %s50
      %s67 = sphi 0, %s51
      %s71 = sphi 0, %s71
      %s73 = sphi 0, %s71
      %s74 = sphi 0, %s73
      %s88 = sphi 0, %s74
      %s92 = sphi 0, %s92
      %s94 = sphi 0, %s92
      %s95 = sphi 0, %s94
      %s109 = sphi 0, %s95
      %s117 = sphi 0, %s119
      %s120 = sphi 0, %s117
      %s121 = sphi 0, %s120
      %s137 = sphi 0, %s121
      %s143 = sphi 0, %s145
      %s146 = sphi 0, %s143
      %s147 = sphi 0, %s146
      %s163 = sphi 0, %s147
      %s171 = sphi 0, %s173
      %s174 = sphi 0, %s171
      %s175 = sphi 0, %s174
      %s191 = sphi 0, %s175
    $region4: #{tpu_custom_call.1} parent=1 // loop_header_branch
      %21 = sbr.rel (%p19) target = $region8
    $region5: #{tpu_custom_call.1} parent=1 // loop_body
      %s23 = ssub.s32 %s18, 1
      %s24 = ssub.s32 %s18, 2
      %s34 = sadd.s32 1, %s27
      %p35 = scmp.ge.s32.totalorder %s34, 2
      %s36 = scalar_select %p35, 0, %s34
      %s37 = sadd.s32 1, %s26
      %s38 = scalar_select %p35, %s37, %s26
      %p39 = scmp.ge.s32.totalorder %s38, 3
      %s40 = scalar_select %p39, 0, %s38
      %s41 = sadd.s32 1, %s25
      %s42 = scalar_select %p39, %s41, %s25
      %p43 = scmp.ge.s32.totalorder %s42, 2
      %s44 = scalar_select %p43, 0, %s42
      %s45 = ssub.s32 %s25, %s44
      %p46 = scmp.eq.s32.totalorder %s45, 0
      %s48 = sadd.s32 %s47, 1
      %s49 = scalar_select %p46, %s47, %s48
      %p52 = pneg %p46
      %p53 = scmp.eq.s32.totalorder %s18, 11
      %p54 = por %p52, %p53
      %p55 = scmp.ne.s32.totalorder %s47, %s50
      %p56 = scmp.eq.s32.totalorder %s18, 0
      %p57 = por %p55, %p56
      %p58 = scmp.ne.s32.totalorder %s47, %s50
      %p59 = scmp.eq.s32.totalorder %s23, 11
      %p60 = por %p58, %p59
      %p61 = scmp.ne.s32.totalorder %s50, %s51
      %p62 = scmp.eq.s32.totalorder %s23, 0
      %p63 = por %p61, %p62
      %p64 = scmp.ne.s32.totalorder %s50, %s51
      %p65 = scmp.eq.s32.totalorder %s24, 11
      %p66 = por %p64, %p65
      %p68 = scmp.ne.s32.totalorder %s51, %s67
      %p69 = scmp.eq.s32.totalorder %s24, 0
      %p70 = por %p68, %p69
      %s72 = sadd.s32 %s71, 1
      %p75 = scmp.eq.s32.totalorder %s18, 11
      %p76 = scmp.ne.s32.totalorder %s71, %s73
      %p77 = scmp.eq.s32.totalorder %s18, 0
      %p78 = por %p76, %p77
      %p79 = scmp.ne.s32.totalorder %s71, %s73
      %p80 = scmp.eq.s32.totalorder %s23, 11
      %p81 = por %p79, %p80
      %p82 = scmp.ne.s32.totalorder %s73, %s74
      %p83 = scmp.eq.s32.totalorder %s23, 0
      %p84 = por %p82, %p83
      %p85 = scmp.ne.s32.totalorder %s73, %s74
      %p86 = scmp.eq.s32.totalorder %s24, 11
      %p87 = por %p85, %p86
      %p89 = scmp.ne.s32.totalorder %s74, %s88
      %p90 = scmp.eq.s32.totalorder %s24, 0
      %p91 = por %p89, %p90
      %s93 = sadd.s32 %s92, 1
      %p96 = scmp.eq.s32.totalorder %s18, 11
      %p97 = scmp.ne.s32.totalorder %s92, %s94
      %p98 = scmp.eq.s32.totalorder %s18, 0
      %p99 = por %p97, %p98
      %p100 = scmp.ne.s32.totalorder %s92, %s94
      %p101 = scmp.eq.s32.totalorder %s23, 11
      %p102 = por %p100, %p101
      %p103 = scmp.ne.s32.totalorder %s94, %s95
      %p104 = scmp.eq.s32.totalorder %s23, 0
      %p105 = por %p103, %p104
      %p106 = scmp.ne.s32.totalorder %s94, %s95
      %p107 = scmp.eq.s32.totalorder %s24, 11
      %p108 = por %p106, %p107
      %p110 = scmp.ne.s32.totalorder %s95, %s109
      %p111 = scmp.eq.s32.totalorder %s24, 0
      %p112 = por %p110, %p111
      %s113 = ssub.s32 %s27, %s36
      %s114 = ssub.s32 %s26, %s40
      %s115 = sor.u32 %s113, %s114
      %p116 = scmp.eq.s32.totalorder %s115, 0
      %s118 = sadd.s32 %s117, 1
      %s119 = scalar_select %p116, %s117, %s118
      %p122 = pneg %p116
      %p123 = scmp.eq.s32.totalorder %s18, 11
      %p124 = por %p122, %p123
      %p125 = scmp.ne.s32.totalorder %s117, %s120
      %p126 = scmp.eq.s32.totalorder %s18, 0
      %p127 = por %p125, %p126
      %p128 = scmp.ne.s32.totalorder %s117, %s120
      %p129 = scmp.eq.s32.totalorder %s23, 11
      %p130 = por %p128, %p129
      %p131 = scmp.ne.s32.totalorder %s120, %s121
      %p132 = scmp.eq.s32.totalorder %s23, 0
      %p133 = por %p131, %p132
      %p134 = scmp.ne.s32.totalorder %s120, %s121
      %p135 = scmp.eq.s32.totalorder %s24, 11
      %p136 = por %p134, %p135
      %p138 = scmp.ne.s32.totalorder %s121, %s137
      %p139 = scmp.eq.s32.totalorder %s24, 0
      %p140 = por %p138, %p139
      %s141 = ssub.s32 %s26, %s40
      %p142 = scmp.eq.s32.totalorder %s141, 0
      %s144 = sadd.s32 %s143, 1
      %s145 = scalar_select %p142, %s143, %s144
      %p148 = pneg %p142
      %p149 = scmp.eq.s32.totalorder %s18, 11
      %p150 = por %p148, %p149
      %p151 = scmp.ne.s32.totalorder %s143, %s146
      %p152 = scmp.eq.s32.totalorder %s18, 0
      %p153 = por %p151, %p152
      %p154 = scmp.ne.s32.totalorder %s143, %s146
      %p155 = scmp.eq.s32.totalorder %s23, 11
      %p156 = por %p154, %p155
      %p157 = scmp.ne.s32.totalorder %s146, %s147
      %p158 = scmp.eq.s32.totalorder %s23, 0
      %p159 = por %p157, %p158
      %p160 = scmp.ne.s32.totalorder %s146, %s147
      %p161 = scmp.eq.s32.totalorder %s24, 11
      %p162 = por %p160, %p161
      %p164 = scmp.ne.s32.totalorder %s147, %s163
      %p165 = scmp.eq.s32.totalorder %s24, 0
      %p166 = por %p164, %p165
      %s167 = ssub.s32 %s25, %s44
      %s168 = ssub.s32 %s26, %s40
      %s169 = sor.u32 %s167, %s168
      %p170 = scmp.eq.s32.totalorder %s169, 0
      %s172 = sadd.s32 %s171, 1
      %s173 = scalar_select %p170, %s171, %s172
      %p176 = pneg %p170
      %p177 = scmp.eq.s32.totalorder %s18, 11
      %p178 = por %p176, %p177
      %p179 = scmp.ne.s32.totalorder %s171, %s174
      %p180 = scmp.eq.s32.totalorder %s18, 0
      %p181 = por %p179, %p180
      %p182 = scmp.ne.s32.totalorder %s171, %s174
      %p183 = scmp.eq.s32.totalorder %s23, 11
      %p184 = por %p182, %p183
      %p185 = scmp.ne.s32.totalorder %s174, %s175
      %p186 = scmp.eq.s32.totalorder %s23, 0
      %p187 = por %p185, %p186
      %p188 = scmp.ne.s32.totalorder %s174, %s175
      %p189 = scmp.eq.s32.totalorder %s24, 11
      %p190 = por %p188, %p189
      %p192 = scmp.ne.s32.totalorder %s175, %s191
      %p193 = scmp.eq.s32.totalorder %s24, 0
      %p194 = por %p192, %p193
      %p195 = scmp.le.s32.totalorder 1, %s18
      %p196 = scmp.lt.s32.totalorder %s18, 13
      %p197 = pnand %p195, %p196
      %p198 = pneg %p197
      // Predicated region
      $region9: #{tpu_custom_call.1} parent=5 // pred_check
        _
      $region10: #{tpu_custom_call.1} parent=5 // pred_check_branch
        %200 = sbr.rel (%p197) target = $region12
      $region11: #{tpu_custom_call.1} parent=5 // pred_region
        %s201 = ssub.s32 %s18, 1
        // Predicated region
        $region13: #{tpu_custom_call.1} parent=11 // pred_check
          %p202 = pneg %p84
        $region14: #{tpu_custom_call.1} parent=11 // pred_check_branch
          %204 = sbr.rel (%p202) target = $region16
        $region15: #{tpu_custom_call.1} parent=11 // pred_region
          %s206 = ssub.s32 64, 64
          %207 = vsyncadd [#allocation10], %s206
          %s209 = sshll.u32 [#allocation9], 4
          %s210 = int_to_ptr.vmem [resolvable:$true] %s209
          %212 = dma.hbm_to_vmem [thread:$0]  %s1, 64, %s210, [#allocation10]
        $region16: #{tpu_custom_call.1} parent=11 // pred_fallthru
          _
        // Predicated region
        $region17: #{tpu_custom_call.1} parent=11 // pred_check
          %p213 = pneg %p105
        $region18: #{tpu_custom_call.1} parent=11 // pred_check_branch
          %215 = sbr.rel (%p213) target = $region20
        $region19: #{tpu_custom_call.1} parent=11 // pred_region
          _
        $region20: #{tpu_custom_call.1} parent=11 // pred_fallthru
          _
      $region12: #{tpu_custom_call.1} parent=5 // pred_fallthru
        _
      %p216 = scmp.lt.s32.totalorder %s18, 12
      // Predicated region
      $region21: #{tpu_custom_call.1} parent=5 // pred_check
        %p217 = pneg %p216
      $region22: #{tpu_custom_call.1} parent=5 // pred_check_branch
        %219 = sbr.rel (%p217) target = $region24
      $region23: #{tpu_custom_call.1} parent=5 // pred_region
        // Predicated region
        $region25: #{tpu_custom_call.1} parent=23 // pred_check
          %p220 = pneg %p57
        $region26: #{tpu_custom_call.1} parent=23 // pred_check_branch
          %222 = sbr.rel (%p220) target = $region28
        $region27: #{tpu_custom_call.1} parent=23 // pred_region
          %s223 = sand.u32 %s18, 1
          %s224 = scalar_lea.sflag [#allocation7], %s223
          %s225 = sand.u32 %s47, 1
          %s226 = smul.addr %s225, 512
          %s227 = scalar_lea.vmem [#allocation6], %s226
          %s228 = smul.u32 16, %s25
          %s229 = ssub.s32 25, %s228
          %p230 = scmp.lt.s32.totalorder %s229, 16
          %s231 = scalar_select %p230, %s229, 16
          %s232 = smul.u32 128, %s231
          %s233 = smul.u32 %s232, 4
          %s235 = ssub.s32 8192, %s233
          %236 = vsyncadd %s224, %s235
          %p237 = scmp.ne.s32.totalorder 0, %s233
          %s238 = smul.addr %s228, 4
          %s239 = smul.addr %s238, 128
          %s240 = scalar_lea.hbm %s0, %s239
          %s241 = smul.u32 32, %s231
          %s242 = sshll.u32 %s227, 4
          %s243 = int_to_ptr.vmem [resolvable:$true] %s242
          %s244 = sshll.u32 %s241, 4
          %248 = dma.hbm_to_vmem [thread:$0]  (%p237), %s240, %s244, %s243, %s224, 512, 512, 32
        $region28: #{tpu_custom_call.1} parent=23 // pred_fallthru
          _
        // Predicated region
        $region29: #{tpu_custom_call.1} parent=23 // pred_check
          %p249 = pneg %p127
        $region30: #{tpu_custom_call.1} parent=23 // pred_check_branch
          %251 = sbr.rel (%p249) target = $region32
        $region31: #{tpu_custom_call.1} parent=23 // pred_region
          %s252 = sand.u32 %s18, 1
          %s253 = scalar_lea.sflag [#allocation7], %s252
          %s254 = sand.u32 %s117, 1
          %s255 = smul.addr %s254, 256
          %s256 = scalar_lea.vmem [#allocation11], %s255
          %s257 = smul.u32 32, %s27
          %s258 = smul.u32 2, %s26
          %s259 = ssub.s32 5, %s258
          %p260 = scmp.lt.s32.totalorder %s259, 2
          %s261 = scalar_select %p260, %s259, 2
          %s262 = smul.u32 2048, %s261
          %s264 = ssub.s32 4096, %s262
          %265 = vsyncadd %s253, %s264
          %p266 = scmp.ne.s32.totalorder 0, %s262
          %s267 = smul.addr %s257, 5
          %s268 = sadd.s32 %s258, %s267
          %s269 = smul.addr %s268, 64
          %s270 = scalar_lea.hbm %s3, %s269
          %s271 = smul.u32 %s261, 4
          %s272 = smul.u32 %s271, 32
          %s273 = sshll.u32 %s256, 4
          %s274 = int_to_ptr.vmem [resolvable:$true] %s273
          %s275 = sshll.u32 %s272, 4
          %279 = dma.hbm_to_vmem [thread:$0]  (%p266), %s270, %s275, %s274, %s253, 320, 128, %s271
        $region32: #{tpu_custom_call.1} parent=23 // pred_fallthru
          _
        // Predicated region
        $region33: #{tpu_custom_call.1} parent=23 // pred_check
          %p280 = pneg %p153
        $region34: #{tpu_custom_call.1} parent=23 // pred_check_branch
          %282 = sbr.rel (%p280) target = $region36
        $region35: #{tpu_custom_call.1} parent=23 // pred_region
          %s283 = smul.u32 2, %s26
          %s284 = ssub.s32 5, %s283
          %p285 = scmp.lt.s32.totalorder %s284, 2
          %s286 = scalar_select %p285, %s284, 2
          %s287 = smul.u32 16, %s286
          %p288 = scmp.lt.s32.totalorder %s283, 4
          %s289 = scalar_select %p288, %s283, 4
          %s290 = scalar_lea.vmem %s4, %s289
          %s291 = smul.u32 2, %s26
          %s292 = ssub.s32 5, %s291
          %p293 = scmp.lt.s32.totalorder %s292, 2
          %s294 = scalar_select %p293, %s292, 2
          %s295 = smul.u32 16, %s294
        $region36: #{tpu_custom_call.1} parent=23 // pred_fallthru
          _
      $region24: #{tpu_custom_call.1} parent=5 // pred_fallthru
        _
      %p296 = scmp.le.s32.totalorder 1, %s18
      %p297 = scmp.lt.s32.totalorder %s18, 13
      %p298 = pnand %p296, %p297
      %p299 = pneg %p298
      // Predicated region
      $region37: #{tpu_custom_call.1} parent=5 // pred_check
        _
      $region38: #{tpu_custom_call.1} parent=5 // pred_check_branch
        %301 = sbr.rel (%p298) target = $region40
      $region39: #{tpu_custom_call.1} parent=5 // pred_region
        %s302 = ssub.s32 %s18, 1
        %s303 = sand.u32 %s23, 1
        %s304 = scalar_lea.sflag [#allocation7], %s303
        %s305 = sand.u32 %s50, 1
        %s306 = smul.addr %s305, 512
        %s307 = scalar_lea.vmem [#allocation6], %s306
        // Predicated region
        $region41: #{tpu_custom_call.1} parent=39 // pred_check
          %p308 = pneg %p63
        $region42: #{tpu_custom_call.1} parent=39 // pred_check_branch
          %310 = sbr.rel (%p308) target = $region44
        $region43: #{tpu_custom_call.1} parent=39 // pred_region
          %311 = dma.done %s304, 8192
        $region44: #{tpu_custom_call.1} parent=39 // pred_fallthru
          _
        // Predicated region
        $region45: #{tpu_custom_call.1} parent=39 // pred_check
          %p312 = pneg %p84
        $region46: #{tpu_custom_call.1} parent=39 // pred_check_branch
          %314 = sbr.rel (%p312) target = $region48
        $region47: #{tpu_custom_call.1} parent=39 // pred_region
          %315 = dma.done [#allocation10], 64
        $region48: #{tpu_custom_call.1} parent=39 // pred_fallthru
          _
        %s316 = sand.u32 %s23, 1
        %s317 = scalar_lea.sflag [#allocation7], %s316
        %s318 = sand.u32 %s120, 1
        %s319 = smul.addr %s318, 256
        %s320 = scalar_lea.vmem [#allocation11], %s319
        // Predicated region
        $region49: #{tpu_custom_call.1} parent=39 // pred_check
          %p321 = pneg %p133
        $region50: #{tpu_custom_call.1} parent=39 // pred_check_branch
          %323 = sbr.rel (%p321) target = $region52
        $region51: #{tpu_custom_call.1} parent=39 // pred_region
          %324 = dma.done %s317, 4096
        $region52: #{tpu_custom_call.1} parent=39 // pred_fallthru
          _
        %s325 = sand.u32 %s23, 1
        %s326 = scalar_lea.sflag [#allocation7], %s325
        %s327 = sand.u32 %s50, 1
        %s328 = smul.addr %s327, 512
        %s329 = scalar_lea.vmem [#allocation6], %s328
        %p330 = pneg %p63
        %p331 = pneg %p60
        %p332 = pneg %p84
        %p333 = pneg %p81
        %p334 = pneg %p105
        %p335 = pneg %p102
        %s336 = sand.u32 %s23, 1
        %s337 = scalar_lea.sflag [#allocation7], %s336
        %s338 = sand.u32 %s120, 1
        %s339 = smul.addr %s338, 256
        %s340 = scalar_lea.vmem [#allocation11], %s339
        %p341 = pneg %p133
        %p342 = pneg %p130
        %s343 = smul.u32 2, %s29
        %s344 = ssub.s32 5, %s343
        %p345 = scmp.lt.s32.totalorder %s344, 2
        %s346 = scalar_select %p345, %s344, 2
        %s347 = smul.u32 16, %s346
        %p348 = scmp.lt.s32.totalorder %s343, 4
        %s349 = scalar_select %p348, %s343, 4
        %s350 = scalar_lea.vmem %s4, %s349
        %p351 = pneg %p159
        %p352 = pneg %p156
        %p353 = pneg %p187
        %p354 = pneg %p184
        %s355 = sand.u32 %s174, 1
        %s356 = scalar_lea.sflag [#allocation8], %s355
        %s357 = sand.u32 %s174, 1
        %s358 = smul.addr %s357, 256
        %s359 = scalar_lea.vmem [#allocation12], %s358
        %s360 = smul.u32 16, %s28
        %s361 = ssub.s32 25, %s360
        %p362 = scmp.lt.s32.totalorder %s361, 16
        %s363 = scalar_select %p362, %s361, 16
        %s364 = smul.u32 128, %s363
        %s365 = smul.u32 %s364, 4
        %s366 = smul.u32 32, %s30
        %s367 = smul.u32 2, %s29
        %s368 = ssub.s32 5, %s367
        %p369 = scmp.lt.s32.totalorder %s368, 2
        %s370 = scalar_select %p369, %s368, 2
        %s371 = smul.u32 2048, %s370
        %s372 = smul.u32 2, %s29
        %s373 = ssub.s32 5, %s372
        %p374 = scmp.lt.s32.totalorder %s373, 2
        %s375 = scalar_select %p374, %s373, 2
        %s376 = smul.u32 16, %s375
        %p377 = scmp.lt.s32.totalorder %s372, 4
        %s378 = scalar_select %p377, %s372, 4
        %s379 = scalar_lea.vmem %s4, %s378
        %s380 = smul.u32 2, %s29
        %s381 = ssub.s32 5, %s380
        %p382 = scmp.lt.s32.totalorder %s381, 2
        %s383 = scalar_select %p382, %s381, 2
        %s384 = smul.u32 16, %s383
        %s385 = smul.u32 16, %s28
        %s386 = smul.u32 2, %s29
        %s387 = ssub.s32 25, %s385
        %p388 = scmp.lt.s32.totalorder %s387, 16
        %s389 = scalar_select %p388, %s387, 16
        %s390 = smul.u32 128, %s389
        %s391 = ssub.s32 5, %s386
        %p392 = scmp.lt.s32.totalorder %s391, 2
        %s393 = scalar_select %p392, %s391, 2
        %s394 = smul.u32 %s390, %s393
        %p395 = scmp.eq.s32.totalorder %s30, 0
        // Predicated region
        $region53: #{tpu_custom_call.1} parent=39 // pred_check
          %p396 = pneg %p395
        $region54: #{tpu_custom_call.1} parent=39 // pred_check_branch
          %398 = sbr.rel (%p396) target = $region56
        $region55: #{tpu_custom_call.1} parent=39 // pred_region
          %399 = vst [vmem:[#allocation5] sm:$0xff] 0.0
          %400 = vst [vmem:[#allocation5 + $0x8] sm:$0xff] 0.0
          %401 = vst [vmem:[#allocation5 + $0x10] sm:$0xff] 0.0
          %402 = vst [vmem:[#allocation5 + $0x18] sm:$0xff] 0.0
          %403 = vst [vmem:[#allocation5 + $0x20] sm:$0xff] 0.0
          %404 = vst [vmem:[#allocation5 + $0x28] sm:$0xff] 0.0
          %405 = vst [vmem:[#allocation5 + $0x30] sm:$0xff] 0.0
          %406 = vst [vmem:[#allocation5 + $0x38] sm:$0xff] 0.0
          %407 = vst [vmem:[#allocation5 + $0x40] sm:$0xff] 0.0
          %408 = vst [vmem:[#allocation5 + $0x48] sm:$0xff] 0.0
          %409 = vst [vmem:[#allocation5 + $0x50] sm:$0xff] 0.0
          %410 = vst [vmem:[#allocation5 + $0x58] sm:$0xff] 0.0
          %411 = vst [vmem:[#allocation5 + $0x60] sm:$0xff] 0.0
          %412 = vst [vmem:[#allocation5 + $0x68] sm:$0xff] 0.0
          %413 = vst [vmem:[#allocation5 + $0x70] sm:$0xff] 0.0
          %414 = vst [vmem:[#allocation5 + $0x78] sm:$0xff] 0.0
          %415 = vst [vmem:[#allocation5 + $0x80] sm:$0xff] 0.0
          %416 = vst [vmem:[#allocation5 + $0x88] sm:$0xff] 0.0
          %417 = vst [vmem:[#allocation5 + $0x90] sm:$0xff] 0.0
          %418 = vst [vmem:[#allocation5 + $0x98] sm:$0xff] 0.0
          %419 = vst [vmem:[#allocation5 + $0xa0] sm:$0xff] 0.0
          %420 = vst [vmem:[#allocation5 + $0xa8] sm:$0xff] 0.0
          %421 = vst [vmem:[#allocation5 + $0xb0] sm:$0xff] 0.0
          %422 = vst [vmem:[#allocation5 + $0xb8] sm:$0xff] 0.0
          %423 = vst [vmem:[#allocation5 + $0xc0] sm:$0xff] 0.0
          %424 = vst [vmem:[#allocation5 + $0xc8] sm:$0xff] 0.0
          %425 = vst [vmem:[#allocation5 + $0xd0] sm:$0xff] 0.0
          %426 = vst [vmem:[#allocation5 + $0xd8] sm:$0xff] 0.0
          %427 = vst [vmem:[#allocation5 + $0xe0] sm:$0xff] 0.0
          %428 = vst [vmem:[#allocation5 + $0xe8] sm:$0xff] 0.0
          %429 = vst [vmem:[#allocation5 + $0xf0] sm:$0xff] 0.0
          %430 = vst [vmem:[#allocation5 + $0xf8] sm:$0xff] 0.0
        $region56: #{tpu_custom_call.1} parent=39 // pred_fallthru
          _
        %p431 = scmp.eq.s32.totalorder %s29, 0
        %p432 = pnand %p431, %p395
        %p433 = pneg %p432
        // Predicated region
        $region57: #{tpu_custom_call.1} parent=39 // pred_check
          _
        $region58: #{tpu_custom_call.1} parent=39 // pred_check_branch
          %435 = sbr.rel (%p432) target = $region60
        $region59: #{tpu_custom_call.1} parent=39 // pred_region
          %v436 = vld [vmem:[%s307] sm:$0xff]
          %v437 = vld [vmem:[%s307 + $0x8] sm:$0xff]
          %v438 = vld [vmem:[%s307 + $0x10] sm:$0xff]
          %v439 = vld [vmem:[%s307 + $0x18] sm:$0xff]
          %v440 = vld [vmem:[%s307 + $0x20] sm:$0xff]
          %v441 = vld [vmem:[%s307 + $0x28] sm:$0xff]
          %v442 = vld [vmem:[%s307 + $0x30] sm:$0xff]
          %v443 = vld [vmem:[%s307 + $0x38] sm:$0xff]
          %v444 = vld [vmem:[%s307 + $0x40] sm:$0xff]
          %v445 = vld [vmem:[%s307 + $0x48] sm:$0xff]
          %v446 = vld [vmem:[%s307 + $0x50] sm:$0xff]
          %v447 = vld [vmem:[%s307 + $0x58] sm:$0xff]
          %v448 = vld [vmem:[%s307 + $0x60] sm:$0xff]
          %v449 = vld [vmem:[%s307 + $0x68] sm:$0xff]
          %v450 = vld [vmem:[%s307 + $0x70] sm:$0xff]
          %v451 = vld [vmem:[%s307 + $0x78] sm:$0xff]
          %v452 = vld [vmem:[%s307 + $0x80] sm:$0xff]
          %v453 = vld [vmem:[%s307 + $0x88] sm:$0xff]
          %v454 = vld [vmem:[%s307 + $0x90] sm:$0xff]
          %v455 = vld [vmem:[%s307 + $0x98] sm:$0xff]
          %v456 = vld [vmem:[%s307 + $0xa0] sm:$0xff]
          %v457 = vld [vmem:[%s307 + $0xa8] sm:$0xff]
          %v458 = vld [vmem:[%s307 + $0xb0] sm:$0xff]
          %v459 = vld [vmem:[%s307 + $0xb8] sm:$0xff]
          %v460 = vld [vmem:[%s307 + $0xc0] sm:$0xff]
          %v461 = vld [vmem:[%s307 + $0xc8] sm:$0xff]
          %v462 = vld [vmem:[%s307 + $0xd0] sm:$0xff]
          %v463 = vld [vmem:[%s307 + $0xd8] sm:$0xff]
          %v464 = vld [vmem:[%s307 + $0xe0] sm:$0xff]
          %v465 = vld [vmem:[%s307 + $0xe8] sm:$0xff]
          %v466 = vld [vmem:[%s307 + $0xf0] sm:$0xff]
          %v467 = vld [vmem:[%s307 + $0xf8] sm:$0xff]
          %v468 = vld [vmem:[%s307 + $0x100] sm:$0xff]
          %v469 = vld [vmem:[%s307 + $0x108] sm:$0xff]
          %v470 = vld [vmem:[%s307 + $0x110] sm:$0xff]
          %v471 = vld [vmem:[%s307 + $0x118] sm:$0xff]
          %v472 = vld [vmem:[%s307 + $0x120] sm:$0xff]
          %v473 = vld [vmem:[%s307 + $0x128] sm:$0xff]
          %v474 = vld [vmem:[%s307 + $0x130] sm:$0xff]
          %v475 = vld [vmem:[%s307 + $0x138] sm:$0xff]
          %v476 = vld [vmem:[%s307 + $0x140] sm:$0xff]
          %v477 = vld [vmem:[%s307 + $0x148] sm:$0xff]
          %v478 = vld [vmem:[%s307 + $0x150] sm:$0xff]
          %v479 = vld [vmem:[%s307 + $0x158] sm:$0xff]
          %v480 = vld [vmem:[%s307 + $0x160] sm:$0xff]
          %v481 = vld [vmem:[%s307 + $0x168] sm:$0xff]
          %v482 = vld [vmem:[%s307 + $0x170] sm:$0xff]
          %v483 = vld [vmem:[%s307 + $0x178] sm:$0xff]
          %v484 = vld [vmem:[%s307 + $0x180] sm:$0xff]
          %v485 = vld [vmem:[%s307 + $0x188] sm:$0xff]
          %v486 = vld [vmem:[%s307 + $0x190] sm:$0xff]
          %v487 = vld [vmem:[%s307 + $0x198] sm:$0xff]
          %v488 = vld [vmem:[%s307 + $0x1a0] sm:$0xff]
          %v489 = vld [vmem:[%s307 + $0x1a8] sm:$0xff]
          %v490 = vld [vmem:[%s307 + $0x1b0] sm:$0xff]
          %v491 = vld [vmem:[%s307 + $0x1b8] sm:$0xff]
          %v492 = vld [vmem:[%s307 + $0x1c0] sm:$0xff]
          %v493 = vld [vmem:[%s307 + $0x1c8] sm:$0xff]
          %v494 = vld [vmem:[%s307 + $0x1d0] sm:$0xff]
          %v495 = vld [vmem:[%s307 + $0x1d8] sm:$0xff]
          %v496 = vld [vmem:[%s307 + $0x1e0] sm:$0xff]
          %v497 = vld [vmem:[%s307 + $0x1e8] sm:$0xff]
          %v498 = vld [vmem:[%s307 + $0x1f0] sm:$0xff]
          %v499 = vld [vmem:[%s307 + $0x1f8] sm:$0xff]
          %v500 = vadd.f32 %v436, %v437
          %v501 = vadd.f32 %v500, %v438
          %v502 = vadd.f32 %v501, %v439
          %503 = vadd.xlane.f32.xlu0 %v502
          %v504 = vpop.xlane.xlu0 %503
          %v505 = vadd.f32 %v440, %v441
          %v506 = vadd.f32 %v505, %v442
          %v507 = vadd.f32 %v506, %v443
          %508 = vadd.xlane.f32.xlu0 %v507
          %v509 = vpop.xlane.xlu0 %508
          %v510 = vadd.f32 %v444, %v445
          %v511 = vadd.f32 %v510, %v446
          %v512 = vadd.f32 %v511, %v447
          %513 = vadd.xlane.f32.xlu0 %v512
          %v514 = vpop.xlane.xlu0 %513
          %v515 = vadd.f32 %v448, %v449
          %v516 = vadd.f32 %v515, %v450
          %v517 = vadd.f32 %v516, %v451
          %518 = vadd.xlane.f32.xlu0 %v517
          %v519 = vpop.xlane.xlu0 %518
          %v520 = vadd.f32 %v452, %v453
          %v521 = vadd.f32 %v520, %v454
          %v522 = vadd.f32 %v521, %v455
          %523 = vadd.xlane.f32.xlu0 %v522
          %v524 = vpop.xlane.xlu0 %523
          %v525 = vadd.f32 %v456, %v457
          %v526 = vadd.f32 %v525, %v458
          %v527 = vadd.f32 %v526, %v459
          %528 = vadd.xlane.f32.xlu0 %v527
          %v529 = vpop.xlane.xlu0 %528
          %v530 = vadd.f32 %v460, %v461
          %v531 = vadd.f32 %v530, %v462
          %v532 = vadd.f32 %v531, %v463
          %533 = vadd.xlane.f32.xlu0 %v532
          %v534 = vpop.xlane.xlu0 %533
          %v535 = vadd.f32 %v464, %v465
          %v536 = vadd.f32 %v535, %v466
          %v537 = vadd.f32 %v536, %v467
          %538 = vadd.xlane.f32.xlu0 %v537
          %v539 = vpop.xlane.xlu0 %538
          %v540 = vadd.f32 %v468, %v469
          %v541 = vadd.f32 %v540, %v470
          %v542 = vadd.f32 %v541, %v471
          %543 = vadd.xlane.f32.xlu0 %v542
          %v544 = vpop.xlane.xlu0 %543
          %v545 = vadd.f32 %v472, %v473
          %v546 = vadd.f32 %v545, %v474
          %v547 = vadd.f32 %v546, %v475
          %548 = vadd.xlane.f32.xlu0 %v547
          %v549 = vpop.xlane.xlu0 %548
          %v550 = vadd.f32 %v476, %v477
          %v551 = vadd.f32 %v550, %v478
          %v552 = vadd.f32 %v551, %v479
          %553 = vadd.xlane.f32.xlu0 %v552
          %v554 = vpop.xlane.xlu0 %553
          %v555 = vadd.f32 %v480, %v481
          %v556 = vadd.f32 %v555, %v482
          %v557 = vadd.f32 %v556, %v483
          %558 = vadd.xlane.f32.xlu0 %v557
          %v559 = vpop.xlane.xlu0 %558
          %v560 = vadd.f32 %v484, %v485
          %v561 = vadd.f32 %v560, %v486
          %v562 = vadd.f32 %v561, %v487
          %563 = vadd.xlane.f32.xlu0 %v562
          %v564 = vpop.xlane.xlu0 %563
          %v565 = vadd.f32 %v488, %v489
          %v566 = vadd.f32 %v565, %v490
          %v567 = vadd.f32 %v566, %v491
          %568 = vadd.xlane.f32.xlu0 %v567
          %v569 = vpop.xlane.xlu0 %568
          %v570 = vadd.f32 %v492, %v493
          %v571 = vadd.f32 %v570, %v494
          %v572 = vadd.f32 %v571, %v495
          %573 = vadd.xlane.f32.xlu0 %v572
          %v574 = vpop.xlane.xlu0 %573
          %v575 = vadd.f32 %v496, %v497
          %v576 = vadd.f32 %v575, %v498
          %v577 = vadd.f32 %v576, %v499
          %578 = vadd.xlane.f32.xlu0 %v577
          %v579 = vpop.xlane.xlu0 %578
          %v580 = vmul.f32 %v504, 0.001953125
          %v581 = vmul.f32 %v509, 0.001953125
          %v582 = vmul.f32 %v514, 0.001953125
          %v583 = vmul.f32 %v519, 0.001953125
          %v584 = vmul.f32 %v524, 0.001953125
          %v585 = vmul.f32 %v529, 0.001953125
          %v586 = vmul.f32 %v534, 0.001953125
          %v587 = vmul.f32 %v539, 0.001953125
          %v588 = vmul.f32 %v544, 0.001953125
          %v589 = vmul.f32 %v549, 0.001953125
          %v590 = vmul.f32 %v554, 0.001953125
          %v591 = vmul.f32 %v559, 0.001953125
          %v592 = vmul.f32 %v564, 0.001953125
          %v593 = vmul.f32 %v569, 0.001953125
          %v594 = vmul.f32 %v574, 0.001953125
          %v595 = vmul.f32 %v579, 0.001953125
          %v596 = vmul.f32 %v436, %v436
          %v597 = vmul.f32 %v437, %v437
          %v598 = vmul.f32 %v438, %v438
          %v599 = vmul.f32 %v439, %v439
          %v600 = vmul.f32 %v440, %v440
          %v601 = vmul.f32 %v441, %v441
          %v602 = vmul.f32 %v442, %v442
          %v603 = vmul.f32 %v443, %v443
          %v604 = vmul.f32 %v444, %v444
          %v605 = vmul.f32 %v445, %v445
          %v606 = vmul.f32 %v446, %v446
          %v607 = vmul.f32 %v447, %v447
          %v608 = vmul.f32 %v448, %v448
          %v609 = vmul.f32 %v449, %v449
          %v610 = vmul.f32 %v450, %v450
          %v611 = vmul.f32 %v451, %v451
          %v612 = vmul.f32 %v452, %v452
          %v613 = vmul.f32 %v453, %v453
          %v614 = vmul.f32 %v454, %v454
          %v615 = vmul.f32 %v455, %v455
          %v616 = vmul.f32 %v456, %v456
          %v617 = vmul.f32 %v457, %v457
          %v618 = vmul.f32 %v458, %v458
          %v619 = vmul.f32 %v459, %v459
          %v620 = vmul.f32 %v460, %v460
          %v621 = vmul.f32 %v461, %v461
          %v622 = vmul.f32 %v462, %v462
          %v623 = vmul.f32 %v463, %v463
          %v624 = vmul.f32 %v464, %v464
          %v625 = vmul.f32 %v465, %v465
          %v626 = vmul.f32 %v466, %v466
          %v627 = vmul.f32 %v467, %v467
          %v628 = vmul.f32 %v468, %v468
          %v629 = vmul.f32 %v469, %v469
          %v630 = vmul.f32 %v470, %v470
          %v631 = vmul.f32 %v471, %v471
          %v632 = vmul.f32 %v472, %v472
          %v633 = vmul.f32 %v473, %v473
          %v634 = vmul.f32 %v474, %v474
          %v635 = vmul.f32 %v475, %v475
          %v636 = vmul.f32 %v476, %v476
          %v637 = vmul.f32 %v477, %v477
          %v638 = vmul.f32 %v478, %v478
          %v639 = vmul.f32 %v479, %v479
          %v640 = vmul.f32 %v480, %v480
          %v641 = vmul.f32 %v481, %v481
          %v642 = vmul.f32 %v482, %v482
          %v643 = vmul.f32 %v483, %v483
          %v644 = vmul.f32 %v484, %v484
          %v645 = vmul.f32 %v485, %v485
          %v646 = vmul.f32 %v486, %v486
          %v647 = vmul.f32 %v487, %v487
          %v648 = vmul.f32 %v488, %v488
          %v649 = vmul.f32 %v489, %v489
          %v650 = vmul.f32 %v490, %v490
          %v651 = vmul.f32 %v491, %v491
          %v652 = vmul.f32 %v492, %v492
          %v653 = vmul.f32 %v493, %v493
          %v654 = vmul.f32 %v494, %v494
          %v655 = vmul.f32 %v495, %v495
          %v656 = vmul.f32 %v496, %v496
          %v657 = vmul.f32 %v497, %v497
          %v658 = vmul.f32 %v498, %v498
          %v659 = vmul.f32 %v499, %v499
          %v660 = vadd.f32 %v596, %v597
          %v661 = vadd.f32 %v660, %v598
          %v662 = vadd.f32 %v661, %v599
          %663 = vadd.xlane.f32.xlu0 %v662
          %v664 = vpop.xlane.xlu0 %663
          %v665 = vadd.f32 %v600, %v601
          %v666 = vadd.f32 %v665, %v602
          %v667 = vadd.f32 %v666, %v603
          %668 = vadd.xlane.f32.xlu0 %v667
          %v669 = vpop.xlane.xlu0 %668
          %v670 = vadd.f32 %v604, %v605
          %v671 = vadd.f32 %v670, %v606
          %v672 = vadd.f32 %v671, %v607
          %673 = vadd.xlane.f32.xlu0 %v672
          %v674 = vpop.xlane.xlu0 %673
          %v675 = vadd.f32 %v608, %v609
          %v676 = vadd.f32 %v675, %v610
          %v677 = vadd.f32 %v676, %v611
          %678 = vadd.xlane.f32.xlu0 %v677
          %v679 = vpop.xlane.xlu0 %678
          %v680 = vadd.f32 %v612, %v613
          %v681 = vadd.f32 %v680, %v614
          %v682 = vadd.f32 %v681, %v615
          %683 = vadd.xlane.f32.xlu0 %v682
          %v684 = vpop.xlane.xlu0 %683
          %v685 = vadd.f32 %v616, %v617
          %v686 = vadd.f32 %v685, %v618
          %v687 = vadd.f32 %v686, %v619
          %688 = vadd.xlane.f32.xlu0 %v687
          %v689 = vpop.xlane.xlu0 %688
          %v690 = vadd.f32 %v620, %v621
          %v691 = vadd.f32 %v690, %v622
          %v692 = vadd.f32 %v691, %v623
          %693 = vadd.xlane.f32.xlu0 %v692
          %v694 = vpop.xlane.xlu0 %693
          %v695 = vadd.f32 %v624, %v625
          %v696 = vadd.f32 %v695, %v626
          %v697 = vadd.f32 %v696, %v627
          %698 = vadd.xlane.f32.xlu0 %v697
          %v699 = vpop.xlane.xlu0 %698
          %v700 = vadd.f32 %v628, %v629
          %v701 = vadd.f32 %v700, %v630
          %v702 = vadd.f32 %v701, %v631
          %703 = vadd.xlane.f32.xlu0 %v702
          %v704 = vpop.xlane.xlu0 %703
          %v705 = vadd.f32 %v632, %v633
          %v706 = vadd.f32 %v705, %v634
          %v707 = vadd.f32 %v706, %v635
          %708 = vadd.xlane.f32.xlu0 %v707
          %v709 = vpop.xlane.xlu0 %708
          %v710 = vadd.f32 %v636, %v637
          %v711 = vadd.f32 %v710, %v638
          %v712 = vadd.f32 %v711, %v639
          %713 = vadd.xlane.f32.xlu0 %v712
          %v714 = vpop.xlane.xlu0 %713
          %v715 = vadd.f32 %v640, %v641
          %v716 = vadd.f32 %v715, %v642
          %v717 = vadd.f32 %v716, %v643
          %718 = vadd.xlane.f32.xlu0 %v717
          %v719 = vpop.xlane.xlu0 %718
          %v720 = vadd.f32 %v644, %v645
          %v721 = vadd.f32 %v720, %v646
          %v722 = vadd.f32 %v721, %v647
          %723 = vadd.xlane.f32.xlu0 %v722
          %v724 = vpop.xlane.xlu0 %723
          %v725 = vadd.f32 %v648, %v649
          %v726 = vadd.f32 %v725, %v650
          %v727 = vadd.f32 %v726, %v651
          %728 = vadd.xlane.f32.xlu0 %v727
          %v729 = vpop.xlane.xlu0 %728
          %v730 = vadd.f32 %v652, %v653
          %v731 = vadd.f32 %v730, %v654
          %v732 = vadd.f32 %v731, %v655
          %733 = vadd.xlane.f32.xlu0 %v732
          %v734 = vpop.xlane.xlu0 %733
          %v735 = vadd.f32 %v656, %v657
          %v736 = vadd.f32 %v735, %v658
          %v737 = vadd.f32 %v736, %v659
          %738 = vadd.xlane.f32.xlu0 %v737
          %v739 = vpop.xlane.xlu0 %738
          %v740 = vmul.f32 %v664, 0.001953125
          %v741 = vmul.f32 %v669, 0.001953125
          %v742 = vmul.f32 %v674, 0.001953125
          %v743 = vmul.f32 %v679, 0.001953125
          %v744 = vmul.f32 %v684, 0.001953125
          %v745 = vmul.f32 %v689, 0.001953125
          %v746 = vmul.f32 %v694, 0.001953125
          %v747 = vmul.f32 %v699, 0.001953125
          %v748 = vmul.f32 %v704, 0.001953125
          %v749 = vmul.f32 %v709, 0.001953125
          %v750 = vmul.f32 %v714, 0.001953125
          %v751 = vmul.f32 %v719, 0.001953125
          %v752 = vmul.f32 %v724, 0.001953125
          %v753 = vmul.f32 %v729, 0.001953125
          %v754 = vmul.f32 %v734, 0.001953125
          %v755 = vmul.f32 %v739, 0.001953125
          %v756 = vmul.f32 %v580, %v580
          %v757 = vmul.f32 %v581, %v581
          %v758 = vmul.f32 %v582, %v582
          %v759 = vmul.f32 %v583, %v583
          %v760 = vmul.f32 %v584, %v584
          %v761 = vmul.f32 %v585, %v585
          %v762 = vmul.f32 %v586, %v586
          %v763 = vmul.f32 %v587, %v587
          %v764 = vmul.f32 %v588, %v588
          %v765 = vmul.f32 %v589, %v589
          %v766 = vmul.f32 %v590, %v590
          %v767 = vmul.f32 %v591, %v591
          %v768 = vmul.f32 %v592, %v592
          %v769 = vmul.f32 %v593, %v593
          %v770 = vmul.f32 %v594, %v594
          %v771 = vmul.f32 %v595, %v595
          %v772 = vsub.f32 %v740, %v756
          %v773 = vsub.f32 %v741, %v757
          %v774 = vsub.f32 %v742, %v758
          %v775 = vsub.f32 %v743, %v759
          %v776 = vsub.f32 %v744, %v760
          %v777 = vsub.f32 %v745, %v761
          %v778 = vsub.f32 %v746, %v762
          %v779 = vsub.f32 %v747, %v763
          %v780 = vsub.f32 %v748, %v764
          %v781 = vsub.f32 %v749, %v765
          %v782 = vsub.f32 %v750, %v766
          %v783 = vsub.f32 %v751, %v767
          %v784 = vsub.f32 %v752, %v768
          %v785 = vsub.f32 %v753, %v769
          %v786 = vsub.f32 %v754, %v770
          %v787 = vsub.f32 %v755, %v771
          %vm788 = vcmask 7168
          %789 = vst.msk [vmem:[#allocation2] sm:$0xff] %vm788, %v580
          %790 = vst.msk [vmem:[#allocation2 + $0x8] sm:$0xff] %vm788, %v581
          %791 = vst.msk [vmem:[#allocation2 + $0x10] sm:$0xff] %vm788, %v582
          %792 = vst.msk [vmem:[#allocation2 + $0x18] sm:$0xff] %vm788, %v583
          %793 = vst.msk [vmem:[#allocation2 + $0x20] sm:$0xff] %vm788, %v584
          %794 = vst.msk [vmem:[#allocation2 + $0x28] sm:$0xff] %vm788, %v585
          %795 = vst.msk [vmem:[#allocation2 + $0x30] sm:$0xff] %vm788, %v586
          %796 = vst.msk [vmem:[#allocation2 + $0x38] sm:$0xff] %vm788, %v587
          %797 = vst.msk [vmem:[#allocation2 + $0x40] sm:$0xff] %vm788, %v588
          %798 = vst.msk [vmem:[#allocation2 + $0x48] sm:$0xff] %vm788, %v589
          %799 = vst.msk [vmem:[#allocation2 + $0x50] sm:$0xff] %vm788, %v590
          %800 = vst.msk [vmem:[#allocation2 + $0x58] sm:$0xff] %vm788, %v591
          %801 = vst.msk [vmem:[#allocation2 + $0x60] sm:$0xff] %vm788, %v592
          %802 = vst.msk [vmem:[#allocation2 + $0x68] sm:$0xff] %vm788, %v593
          %803 = vst.msk [vmem:[#allocation2 + $0x70] sm:$0xff] %vm788, %v594
          %804 = vst.msk [vmem:[#allocation2 + $0x78] sm:$0xff] %vm788, %v595
          %v805 = vadd.f32 %v772, 1e-05
          %v806 = vadd.f32 %v773, 1e-05
          %v807 = vadd.f32 %v774, 1e-05
          %v808 = vadd.f32 %v775, 1e-05
          %v809 = vadd.f32 %v776, 1e-05
          %v810 = vadd.f32 %v777, 1e-05
          %v811 = vadd.f32 %v778, 1e-05
          %v812 = vadd.f32 %v779, 1e-05
          %v813 = vadd.f32 %v780, 1e-05
          %v814 = vadd.f32 %v781, 1e-05
          %v815 = vadd.f32 %v782, 1e-05
          %v816 = vadd.f32 %v783, 1e-05
          %v817 = vadd.f32 %v784, 1e-05
          %v818 = vadd.f32 %v785, 1e-05
          %v819 = vadd.f32 %v786, 1e-05
          %v820 = vadd.f32 %v787, 1e-05
          %v821 = vrsqrt.pop %v805
          %v822 = vrsqrt.pop %v806
          %v823 = vrsqrt.pop %v807
          %v824 = vrsqrt.pop %v808
          %v825 = vrsqrt.pop %v809
          %v826 = vrsqrt.pop %v810
          %v827 = vrsqrt.pop %v811
          %v828 = vrsqrt.pop %v812
          %v829 = vrsqrt.pop %v813
          %v830 = vrsqrt.pop %v814
          %v831 = vrsqrt.pop %v815
          %v832 = vrsqrt.pop %v816
          %v833 = vrsqrt.pop %v817
          %v834 = vrsqrt.pop %v818
          %v835 = vrsqrt.pop %v819
          %v836 = vrsqrt.pop %v820
          %837 = vst.msk [vmem:[#allocation3] sm:$0xff] %vm788, %v821
          %838 = vst.msk [vmem:[#allocation3 + $0x8] sm:$0xff] %vm788, %v822
          %839 = vst.msk [vmem:[#allocation3 + $0x10] sm:$0xff] %vm788, %v823
          %840 = vst.msk [vmem:[#allocation3 + $0x18] sm:$0xff] %vm788, %v824
          %841 = vst.msk [vmem:[#allocation3 + $0x20] sm:$0xff] %vm788, %v825
          %842 = vst.msk [vmem:[#allocation3 + $0x28] sm:$0xff] %vm788, %v826
          %843 = vst.msk [vmem:[#allocation3 + $0x30] sm:$0xff] %vm788, %v827
          %844 = vst.msk [vmem:[#allocation3 + $0x38] sm:$0xff] %vm788, %v828
          %845 = vst.msk [vmem:[#allocation3 + $0x40] sm:$0xff] %vm788, %v829
          %846 = vst.msk [vmem:[#allocation3 + $0x48] sm:$0xff] %vm788, %v830
          %847 = vst.msk [vmem:[#allocation3 + $0x50] sm:$0xff] %vm788, %v831
          %848 = vst.msk [vmem:[#allocation3 + $0x58] sm:$0xff] %vm788, %v832
          %849 = vst.msk [vmem:[#allocation3 + $0x60] sm:$0xff] %vm788, %v833
          %850 = vst.msk [vmem:[#allocation3 + $0x68] sm:$0xff] %vm788, %v834
          %851 = vst.msk [vmem:[#allocation3 + $0x70] sm:$0xff] %vm788, %v835
          %852 = vst.msk [vmem:[#allocation3 + $0x78] sm:$0xff] %vm788, %v836
        $region60: #{tpu_custom_call.1} parent=39 // pred_fallthru
          _
        %s853 = smul.u32 %s30, 256
        // Predicated region
        $region61: #{tpu_custom_call.1} parent=39 // pred_check
          %p854 = pneg %p431
        $region62: #{tpu_custom_call.1} parent=39 // pred_check_branch
          %856 = sbr.rel (%p854) target = $region64
        $region63: #{tpu_custom_call.1} parent=39 // pred_region
          %s857 = sshra.s32 %s853, 7
          %s858 = sand.u32 %s853, 127
          %s859 = smul.addr %s857, 8
          %s860 = scalar_lea.vmem %s307, %s859 [#allocation6]
          %v861 = vld [vmem:[%s860] sm:$0xff]
          %v862 = vld [vmem:[%s860 + $0x8] sm:$0xff]
          %v863 = vld [vmem:[%s860 + $0x20] sm:$0xff]
          %v864 = vld [vmem:[%s860 + $0x28] sm:$0xff]
          %v865 = vld [vmem:[%s860 + $0x40] sm:$0xff]
          %v866 = vld [vmem:[%s860 + $0x48] sm:$0xff]
          %v867 = vld [vmem:[%s860 + $0x60] sm:$0xff]
          %v868 = vld [vmem:[%s860 + $0x68] sm:$0xff]
          %v869 = vld [vmem:[%s860 + $0x80] sm:$0xff]
          %v870 = vld [vmem:[%s860 + $0x88] sm:$0xff]
          %v871 = vld [vmem:[%s860 + $0xa0] sm:$0xff]
          %v872 = vld [vmem:[%s860 + $0xa8] sm:$0xff]
          %v873 = vld [vmem:[%s860 + $0xc0] sm:$0xff]
          %v874 = vld [vmem:[%s860 + $0xc8] sm:$0xff]
          %v875 = vld [vmem:[%s860 + $0xe0] sm:$0xff]
          %v876 = vld [vmem:[%s860 + $0xe8] sm:$0xff]
          %v877 = vld [vmem:[%s860 + $0x100] sm:$0xff]
          %v878 = vld [vmem:[%s860 + $0x108] sm:$0xff]
          %v879 = vld [vmem:[%s860 + $0x120] sm:$0xff]
          %v880 = vld [vmem:[%s860 + $0x128] sm:$0xff]
          %v881 = vld [vmem:[%s860 + $0x140] sm:$0xff]
          %v882 = vld [vmem:[%s860 + $0x148] sm:$0xff]
          %v883 = vld [vmem:[%s860 + $0x160] sm:$0xff]
          %v884 = vld [vmem:[%s860 + $0x168] sm:$0xff]
          %v885 = vld [vmem:[%s860 + $0x180] sm:$0xff]
          %v886 = vld [vmem:[%s860 + $0x188] sm:$0xff]
          %v887 = vld [vmem:[%s860 + $0x1a0] sm:$0xff]
          %v888 = vld [vmem:[%s860 + $0x1a8] sm:$0xff]
          %v889 = vld [vmem:[%s860 + $0x1c0] sm:$0xff]
          %v890 = vld [vmem:[%s860 + $0x1c8] sm:$0xff]
          %v891 = vld [vmem:[%s860 + $0x1e0] sm:$0xff]
          %v892 = vld [vmem:[%s860 + $0x1e8] sm:$0xff]
          %s893 = scalar_lea.vmem [#allocation9], %s857
          %v894 = vld [vmem:[%s893] sm:$0x3]
          %s895 = scalar_lea.vmem %s2, %s857
          %v896 = vld [vmem:[%s895] sm:$0x3]
          %v897 = vld [vmem:[#allocation2] sm:$0xff]
          %v898 = vld [vmem:[#allocation2 + $0x8] sm:$0xff]
          %v899 = vld [vmem:[#allocation2 + $0x10] sm:$0xff]
          %v900 = vld [vmem:[#allocation2 + $0x18] sm:$0xff]
          %v901 = vld [vmem:[#allocation2 + $0x20] sm:$0xff]
          %v902 = vld [vmem:[#allocation2 + $0x28] sm:$0xff]
          %v903 = vld [vmem:[#allocation2 + $0x30] sm:$0xff]
          %v904 = vld [vmem:[#allocation2 + $0x38] sm:$0xff]
          %v905 = vld [vmem:[#allocation2 + $0x40] sm:$0xff]
          %v906 = vld [vmem:[#allocation2 + $0x48] sm:$0xff]
          %v907 = vld [vmem:[#allocation2 + $0x50] sm:$0xff]
          %v908 = vld [vmem:[#allocation2 + $0x58] sm:$0xff]
          %v909 = vld [vmem:[#allocation2 + $0x60] sm:$0xff]
          %v910 = vld [vmem:[#allocation2 + $0x68] sm:$0xff]
          %v911 = vld [vmem:[#allocation2 + $0x70] sm:$0xff]
          %v912 = vld [vmem:[#allocation2 + $0x78] sm:$0xff]
          %914 = vset.pattern.permute.xlu0 0
          %915 = vperm.xlu0 %914, %v897
          %v916 = vpop.permute.xlu0 %915
          %919 = vset.pattern.permute.xlu0 0
          %920 = vperm.xlu0 %919, %v898
          %v921 = vpop.permute.xlu0 %920
          %924 = vset.pattern.permute.xlu0 0
          %925 = vperm.xlu0 %924, %v899
          %v926 = vpop.permute.xlu0 %925
          %929 = vset.pattern.permute.xlu0 0
          %930 = vperm.xlu0 %929, %v900
          %v931 = vpop.permute.xlu0 %930
          %934 = vset.pattern.permute.xlu0 0
          %935 = vperm.xlu0 %934, %v901
          %v936 = vpop.permute.xlu0 %935
          %939 = vset.pattern.permute.xlu0 0
          %940 = vperm.xlu0 %939, %v902
          %v941 = vpop.permute.xlu0 %940
          %944 = vset.pattern.permute.xlu0 0
          %945 = vperm.xlu0 %944, %v903
          %v946 = vpop.permute.xlu0 %945
          %949 = vset.pattern.permute.xlu0 0
          %950 = vperm.xlu0 %949, %v904
          %v951 = vpop.permute.xlu0 %950
          %954 = vset.pattern.permute.xlu0 0
          %955 = vperm.xlu0 %954, %v905
          %v956 = vpop.permute.xlu0 %955
          %959 = vset.pattern.permute.xlu0 0
          %960 = vperm.xlu0 %959, %v906
          %v961 = vpop.permute.xlu0 %960
          %964 = vset.pattern.permute.xlu0 0
          %965 = vperm.xlu0 %964, %v907
          %v966 = vpop.permute.xlu0 %965
          %969 = vset.pattern.permute.xlu0 0
          %970 = vperm.xlu0 %969, %v908
          %v971 = vpop.permute.xlu0 %970
          %974 = vset.pattern.permute.xlu0 0
          %975 = vperm.xlu0 %974, %v909
          %v976 = vpop.permute.xlu0 %975
          %979 = vset.pattern.permute.xlu0 0
          %980 = vperm.xlu0 %979, %v910
          %v981 = vpop.permute.xlu0 %980
          %984 = vset.pattern.permute.xlu0 0
          %985 = vperm.xlu0 %984, %v911
          %v986 = vpop.permute.xlu0 %985
          %989 = vset.pattern.permute.xlu0 0
          %990 = vperm.xlu0 %989, %v912
          %v991 = vpop.permute.xlu0 %990
          %v993 = vsub.f32 %v861, %v916
          %v994 = vsub.f32 %v862, %v916
          %v995 = vsub.f32 %v863, %v921
          %v996 = vsub.f32 %v864, %v921
          %v997 = vsub.f32 %v865, %v926
          %v998 = vsub.f32 %v866, %v926
          %v999 = vsub.f32 %v867, %v931
          %v1000 = vsub.f32 %v868, %v931
          %v1001 = vsub.f32 %v869, %v936
          %v1002 = vsub.f32 %v870, %v936
          %v1003 = vsub.f32 %v871, %v941
          %v1004 = vsub.f32 %v872, %v941
          %v1005 = vsub.f32 %v873, %v946
          %v1006 = vsub.f32 %v874, %v946
          %v1007 = vsub.f32 %v875, %v951
          %v1008 = vsub.f32 %v876, %v951
          %v1009 = vsub.f32 %v877, %v956
          %v1010 = vsub.f32 %v878, %v956
          %v1011 = vsub.f32 %v879, %v961
          %v1012 = vsub.f32 %v880, %v961
          %v1013 = vsub.f32 %v881, %v966
          %v1014 = vsub.f32 %v882, %v966
          %v1015 = vsub.f32 %v883, %v971
          %v1016 = vsub.f32 %v884, %v971
          %v1017 = vsub.f32 %v885, %v976
          %v1018 = vsub.f32 %v886, %v976
          %v1019 = vsub.f32 %v887, %v981
          %v1020 = vsub.f32 %v888, %v981
          %v1021 = vsub.f32 %v889, %v986
          %v1022 = vsub.f32 %v890, %v986
          %v1023 = vsub.f32 %v891, %v991
          %v1024 = vsub.f32 %v892, %v991
          %v1025 = vld [vmem:[#allocation3] sm:$0xff]
          %v1026 = vld [vmem:[#allocation3 + $0x8] sm:$0xff]
          %v1027 = vld [vmem:[#allocation3 + $0x10] sm:$0xff]
          %v1028 = vld [vmem:[#allocation3 + $0x18] sm:$0xff]
          %v1029 = vld [vmem:[#allocation3 + $0x20] sm:$0xff]
          %v1030 = vld [vmem:[#allocation3 + $0x28] sm:$0xff]
          %v1031 = vld [vmem:[#allocation3 + $0x30] sm:$0xff]
          %v1032 = vld [vmem:[#allocation3 + $0x38] sm:$0xff]
          %v1033 = vld [vmem:[#allocation3 + $0x40] sm:$0xff]
          %v1034 = vld [vmem:[#allocation3 + $0x48] sm:$0xff]
          %v1035 = vld [vmem:[#allocation3 + $0x50] sm:$0xff]
          %v1036 = vld [vmem:[#allocation3 + $0x58] sm:$0xff]
          %v1037 = vld [vmem:[#allocation3 + $0x60] sm:$0xff]
          %v1038 = vld [vmem:[#allocation3 + $0x68] sm:$0xff]
          %v1039 = vld [vmem:[#allocation3 + $0x70] sm:$0xff]
          %v1040 = vld [vmem:[#allocation3 + $0x78] sm:$0xff]
          %1042 = vset.pattern.permute.xlu0 0
          %1043 = vperm.xlu0 %1042, %v1025
          %v1044 = vpop.permute.xlu0 %1043
          %1047 = vset.pattern.permute.xlu0 0
          %1048 = vperm.xlu0 %1047, %v1026
          %v1049 = vpop.permute.xlu0 %1048
          %1052 = vset.pattern.permute.xlu0 0
          %1053 = vperm.xlu0 %1052, %v1027
          %v1054 = vpop.permute.xlu0 %1053
          %1057 = vset.pattern.permute.xlu0 0
          %1058 = vperm.xlu0 %1057, %v1028
          %v1059 = vpop.permute.xlu0 %1058
          %1062 = vset.pattern.permute.xlu0 0
          %1063 = vperm.xlu0 %1062, %v1029
          %v1064 = vpop.permute.xlu0 %1063
          %1067 = vset.pattern.permute.xlu0 0
          %1068 = vperm.xlu0 %1067, %v1030
          %v1069 = vpop.permute.xlu0 %1068
          %1072 = vset.pattern.permute.xlu0 0
          %1073 = vperm.xlu0 %1072, %v1031
          %v1074 = vpop.permute.xlu0 %1073
          %1077 = vset.pattern.permute.xlu0 0
          %1078 = vperm.xlu0 %1077, %v1032
          %v1079 = vpop.permute.xlu0 %1078
          %1082 = vset.pattern.permute.xlu0 0
          %1083 = vperm.xlu0 %1082, %v1033
          %v1084 = vpop.permute.xlu0 %1083
          %1087 = vset.pattern.permute.xlu0 0
          %1088 = vperm.xlu0 %1087, %v1034
          %v1089 = vpop.permute.xlu0 %1088
          %1092 = vset.pattern.permute.xlu0 0
          %1093 = vperm.xlu0 %1092, %v1035
          %v1094 = vpop.permute.xlu0 %1093
          %1097 = vset.pattern.permute.xlu0 0
          %1098 = vperm.xlu0 %1097, %v1036
          %v1099 = vpop.permute.xlu0 %1098
          %1102 = vset.pattern.permute.xlu0 0
          %1103 = vperm.xlu0 %1102, %v1037
          %v1104 = vpop.permute.xlu0 %1103
          %1107 = vset.pattern.permute.xlu0 0
          %1108 = vperm.xlu0 %1107, %v1038
          %v1109 = vpop.permute.xlu0 %1108
          %1112 = vset.pattern.permute.xlu0 0
          %1113 = vperm.xlu0 %1112, %v1039
          %v1114 = vpop.permute.xlu0 %1113
          %1117 = vset.pattern.permute.xlu0 0
          %1118 = vperm.xlu0 %1117, %v1040
          %v1119 = vpop.permute.xlu0 %1118
          %v1121 = vmul.f32 %v993, %v1044
          %v1122 = vmul.f32 %v994, %v1044
          %v1123 = vmul.f32 %v995, %v1049
          %v1124 = vmul.f32 %v996, %v1049
          %v1125 = vmul.f32 %v997, %v1054
          %v1126 = vmul.f32 %v998, %v1054
          %v1127 = vmul.f32 %v999, %v1059
          %v1128 = vmul.f32 %v1000, %v1059
          %v1129 = vmul.f32 %v1001, %v1064
          %v1130 = vmul.f32 %v1002, %v1064
          %v1131 = vmul.f32 %v1003, %v1069
          %v1132 = vmul.f32 %v1004, %v1069
          %v1133 = vmul.f32 %v1005, %v1074
          %v1134 = vmul.f32 %v1006, %v1074
          %v1135 = vmul.f32 %v1007, %v1079
          %v1136 = vmul.f32 %v1008, %v1079
          %v1137 = vmul.f32 %v1009, %v1084
          %v1138 = vmul.f32 %v1010, %v1084
          %v1139 = vmul.f32 %v1011, %v1089
          %v1140 = vmul.f32 %v1012, %v1089
          %v1141 = vmul.f32 %v1013, %v1094
          %v1142 = vmul.f32 %v1014, %v1094
          %v1143 = vmul.f32 %v1015, %v1099
          %v1144 = vmul.f32 %v1016, %v1099
          %v1145 = vmul.f32 %v1017, %v1104
          %v1146 = vmul.f32 %v1018, %v1104
          %v1147 = vmul.f32 %v1019, %v1109
          %v1148 = vmul.f32 %v1020, %v1109
          %v1149 = vmul.f32 %v1021, %v1114
          %v1150 = vmul.f32 %v1022, %v1114
          %v1151 = vmul.f32 %v1023, %v1119
          %v1152 = vmul.f32 %v1024, %v1119
          %v1154 = vlaneseq
          %v1155 = vshrl.u32 %v1154, 7
          %v1156 = vsub.s32 0, %v1155
          %v1157 = vrot.slane %v894, %v1156
          %v1158 = vlaneseq
          %v1159 = vshrl.u32 %v1158, 7
          %v1160 = vsub.s32 1, %v1159
          %v1161 = vrot.slane %v894, %v1160
          %v1164 = vmul.f32 %v1121, %v1157
          %v1165 = vmul.f32 %v1122, %v1161
          %v1166 = vmul.f32 %v1123, %v1157
          %v1167 = vmul.f32 %v1124, %v1161
          %v1168 = vmul.f32 %v1125, %v1157
          %v1169 = vmul.f32 %v1126, %v1161
          %v1170 = vmul.f32 %v1127, %v1157
          %v1171 = vmul.f32 %v1128, %v1161
          %v1172 = vmul.f32 %v1129, %v1157
          %v1173 = vmul.f32 %v1130, %v1161
          %v1174 = vmul.f32 %v1131, %v1157
          %v1175 = vmul.f32 %v1132, %v1161
          %v1176 = vmul.f32 %v1133, %v1157
          %v1177 = vmul.f32 %v1134, %v1161
          %v1178 = vmul.f32 %v1135, %v1157
          %v1179 = vmul.f32 %v1136, %v1161
          %v1180 = vmul.f32 %v1137, %v1157
          %v1181 = vmul.f32 %v1138, %v1161
          %v1182 = vmul.f32 %v1139, %v1157
          %v1183 = vmul.f32 %v1140, %v1161
          %v1184 = vmul.f32 %v1141, %v1157
          %v1185 = vmul.f32 %v1142, %v1161
          %v1186 = vmul.f32 %v1143, %v1157
          %v1187 = vmul.f32 %v1144, %v1161
          %v1188 = vmul.f32 %v1145, %v1157
          %v1189 = vmul.f32 %v1146, %v1161
          %v1190 = vmul.f32 %v1147, %v1157
          %v1191 = vmul.f32 %v1148, %v1161
          %v1192 = vmul.f32 %v1149, %v1157
          %v1193 = vmul.f32 %v1150, %v1161
          %v1194 = vmul.f32 %v1151, %v1157
          %v1195 = vmul.f32 %v1152, %v1161
          %v1197 = vlaneseq
          %v1198 = vshrl.u32 %v1197, 7
          %v1199 = vsub.s32 0, %v1198
          %v1200 = vrot.slane %v896, %v1199
          %v1201 = vlaneseq
          %v1202 = vshrl.u32 %v1201, 7
          %v1203 = vsub.s32 1, %v1202
          %v1204 = vrot.slane %v896, %v1203
          %v1207 = vadd.f32 %v1164, %v1200
          %v1208 = vadd.f32 %v1165, %v1204
          %v1209 = vadd.f32 %v1166, %v1200
          %v1210 = vadd.f32 %v1167, %v1204
          %v1211 = vadd.f32 %v1168, %v1200
          %v1212 = vadd.f32 %v1169, %v1204
          %v1213 = vadd.f32 %v1170, %v1200
          %v1214 = vadd.f32 %v1171, %v1204
          %v1215 = vadd.f32 %v1172, %v1200
          %v1216 = vadd.f32 %v1173, %v1204
          %v1217 = vadd.f32 %v1174, %v1200
          %v1218 = vadd.f32 %v1175, %v1204
          %v1219 = vadd.f32 %v1176, %v1200
          %v1220 = vadd.f32 %v1177, %v1204
          %v1221 = vadd.f32 %v1178, %v1200
          %v1222 = vadd.f32 %v1179, %v1204
          %v1223 = vadd.f32 %v1180, %v1200
          %v1224 = vadd.f32 %v1181, %v1204
          %v1225 = vadd.f32 %v1182, %v1200
          %v1226 = vadd.f32 %v1183, %v1204
          %v1227 = vadd.f32 %v1184, %v1200
          %v1228 = vadd.f32 %v1185, %v1204
          %v1229 = vadd.f32 %v1186, %v1200
          %v1230 = vadd.f32 %v1187, %v1204
          %v1231 = vadd.f32 %v1188, %v1200
          %v1232 = vadd.f32 %v1189, %v1204
          %v1233 = vadd.f32 %v1190, %v1200
          %v1234 = vadd.f32 %v1191, %v1204
          %v1235 = vadd.f32 %v1192, %v1200
          %v1236 = vadd.f32 %v1193, %v1204
          %v1237 = vadd.f32 %v1194, %v1200
          %v1238 = vadd.f32 %v1195, %v1204
          %v1239 = vpack.c.bf16 %v1209, %v1207
          %v1240 = vpack.c.bf16 %v1210, %v1208
          %v1241 = vpack.c.bf16 %v1213, %v1211
          %v1242 = vpack.c.bf16 %v1214, %v1212
          %v1243 = vpack.c.bf16 %v1217, %v1215
          %v1244 = vpack.c.bf16 %v1218, %v1216
          %v1245 = vpack.c.bf16 %v1221, %v1219
          %v1246 = vpack.c.bf16 %v1222, %v1220
          %v1247 = vpack.c.bf16 %v1225, %v1223
          %v1248 = vpack.c.bf16 %v1226, %v1224
          %v1249 = vpack.c.bf16 %v1229, %v1227
          %v1250 = vpack.c.bf16 %v1230, %v1228
          %v1251 = vpack.c.bf16 %v1233, %v1231
          %v1252 = vpack.c.bf16 %v1234, %v1232
          %v1253 = vpack.c.bf16 %v1237, %v1235
          %v1254 = vpack.c.bf16 %v1238, %v1236
          %s1255 = smul.addr %s857, 8
          %s1256 = scalar_lea.vmem [#allocation4], %s1255
          %1257 = vst [vmem:[%s1256] sm:$0xff] %v1239
          %1258 = vst [vmem:[%s1256 + $0x8] sm:$0xff] %v1240
          %1259 = vst [vmem:[%s1256 + $0x20] sm:$0xff] %v1241
          %1260 = vst [vmem:[%s1256 + $0x28] sm:$0xff] %v1242
          %1261 = vst [vmem:[%s1256 + $0x40] sm:$0xff] %v1243
          %1262 = vst [vmem:[%s1256 + $0x48] sm:$0xff] %v1244
          %1263 = vst [vmem:[%s1256 + $0x60] sm:$0xff] %v1245
          %1264 = vst [vmem:[%s1256 + $0x68] sm:$0xff] %v1246
          %1265 = vst [vmem:[%s1256 + $0x80] sm:$0xff] %v1247
          %1266 = vst [vmem:[%s1256 + $0x88] sm:$0xff] %v1248
          %1267 = vst [vmem:[%s1256 + $0xa0] sm:$0xff] %v1249
          %1268 = vst [vmem:[%s1256 + $0xa8] sm:$0xff] %v1250
          %1269 = vst [vmem:[%s1256 + $0xc0] sm:$0xff] %v1251
          %1270 = vst [vmem:[%s1256 + $0xc8] sm:$0xff] %v1252
          %1271 = vst [vmem:[%s1256 + $0xe0] sm:$0xff] %v1253
          %1272 = vst [vmem:[%s1256 + $0xe8] sm:$0xff] %v1254
        $region64: #{tpu_custom_call.1} parent=39 // pred_fallthru
          _
        %v1273 = vld [vmem:[#allocation5] sm:$0xff]
        %v1274 = vld [vmem:[#allocation5 + $0x8] sm:$0xff]
        %v1275 = vld [vmem:[#allocation5 + $0x10] sm:$0xff]
        %v1276 = vld [vmem:[#allocation5 + $0x18] sm:$0xff]
        %v1277 = vld [vmem:[#allocation5 + $0x20] sm:$0xff]
        %v1278 = vld [vmem:[#allocation5 + $0x28] sm:$0xff]
        %v1279 = vld [vmem:[#allocation5 + $0x30] sm:$0xff]
        %v1280 = vld [vmem:[#allocation5 + $0x38] sm:$0xff]
        %v1281 = vld [vmem:[#allocation5 + $0x40] sm:$0xff]
        %v1282 = vld [vmem:[#allocation5 + $0x48] sm:$0xff]
        %v1283 = vld [vmem:[#allocation5 + $0x50] sm:$0xff]
        %v1284 = vld [vmem:[#allocation5 + $0x58] sm:$0xff]
        %v1285 = vld [vmem:[#allocation5 + $0x60] sm:$0xff]
        %v1286 = vld [vmem:[#allocation5 + $0x68] sm:$0xff]
        %v1287 = vld [vmem:[#allocation5 + $0x70] sm:$0xff]
        %v1288 = vld [vmem:[#allocation5 + $0x78] sm:$0xff]
        %v1289 = vld [vmem:[#allocation5 + $0x80] sm:$0xff]
        %v1290 = vld [vmem:[#allocation5 + $0x88] sm:$0xff]
        %v1291 = vld [vmem:[#allocation5 + $0x90] sm:$0xff]
        %v1292 = vld [vmem:[#allocation5 + $0x98] sm:$0xff]
        %v1293 = vld [vmem:[#allocation5 + $0xa0] sm:$0xff]
        %v1294 = vld [vmem:[#allocation5 + $0xa8] sm:$0xff]
        %v1295 = vld [vmem:[#allocation5 + $0xb0] sm:$0xff]
        %v1296 = vld [vmem:[#allocation5 + $0xb8] sm:$0xff]
        %v1297 = vld [vmem:[#allocation5 + $0xc0] sm:$0xff]
        %v1298 = vld [vmem:[#allocation5 + $0xc8] sm:$0xff]
        %v1299 = vld [vmem:[#allocation5 + $0xd0] sm:$0xff]
        %v1300 = vld [vmem:[#allocation5 + $0xd8] sm:$0xff]
        %v1301 = vld [vmem:[#allocation5 + $0xe0] sm:$0xff]
        %v1302 = vld [vmem:[#allocation5 + $0xe8] sm:$0xff]
        %v1303 = vld [vmem:[#allocation5 + $0xf0] sm:$0xff]
        %v1304 = vld [vmem:[#allocation5 + $0xf8] sm:$0xff]
        %s1305 = sshra.s32 %s853, 7
        %s1306 = sand.u32 %s853, 127
        %s1307 = smul.addr %s1305, 8
        %s1308 = scalar_lea.vmem [#allocation4], %s1307
        %v1309 = vld [vmem:[%s1308] sm:$0xff]
        %v1310 = vld [vmem:[%s1308 + $0x8] sm:$0xff]
        %v1311 = vld [vmem:[%s1308 + $0x20] sm:$0xff]
        %v1312 = vld [vmem:[%s1308 + $0x28] sm:$0xff]
        %v1313 = vld [vmem:[%s1308 + $0x40] sm:$0xff]
        %v1314 = vld [vmem:[%s1308 + $0x48] sm:$0xff]
        %v1315 = vld [vmem:[%s1308 + $0x60] sm:$0xff]
        %v1316 = vld [vmem:[%s1308 + $0x68] sm:$0xff]
        %v1317 = vld [vmem:[%s1308 + $0x80] sm:$0xff]
        %v1318 = vld [vmem:[%s1308 + $0x88] sm:$0xff]
        %v1319 = vld [vmem:[%s1308 + $0xa0] sm:$0xff]
        %v1320 = vld [vmem:[%s1308 + $0xa8] sm:$0xff]
        %v1321 = vld [vmem:[%s1308 + $0xc0] sm:$0xff]
        %v1322 = vld [vmem:[%s1308 + $0xc8] sm:$0xff]
        %v1323 = vld [vmem:[%s1308 + $0xe0] sm:$0xff]
        %v1324 = vld [vmem:[%s1308 + $0xe8] sm:$0xff]
        %v1325 = vld [vmem:[%s320] sm:$0xff]
        %v1326 = vld [vmem:[%s320 + $0x8] sm:$0xff]
        %v1327 = vld [vmem:[%s320 + $0x10] sm:$0xff]
        %v1328 = vld [vmem:[%s320 + $0x18] sm:$0xff]
        %v1329 = vld [vmem:[%s320 + $0x20] sm:$0xff]
        %v1330 = vld [vmem:[%s320 + $0x28] sm:$0xff]
        %v1331 = vld [vmem:[%s320 + $0x30] sm:$0xff]
        %v1332 = vld [vmem:[%s320 + $0x38] sm:$0xff]
        %v1333 = vld [vmem:[%s320 + $0x40] sm:$0xff]
        %v1334 = vld [vmem:[%s320 + $0x48] sm:$0xff]
        %v1335 = vld [vmem:[%s320 + $0x50] sm:$0xff]
        %v1336 = vld [vmem:[%s320 + $0x58] sm:$0xff]
        %v1337 = vld [vmem:[%s320 + $0x60] sm:$0xff]
        %v1338 = vld [vmem:[%s320 + $0x68] sm:$0xff]
        %v1339 = vld [vmem:[%s320 + $0x70] sm:$0xff]
        %v1340 = vld [vmem:[%s320 + $0x78] sm:$0xff]
        %v1341 = vld [vmem:[%s320 + $0x80] sm:$0xff]
        %v1342 = vld [vmem:[%s320 + $0x88] sm:$0xff]
        %v1343 = vld [vmem:[%s320 + $0x90] sm:$0xff]
        %v1344 = vld [vmem:[%s320 + $0x98] sm:$0xff]
        %v1345 = vld [vmem:[%s320 + $0xa0] sm:$0xff]
        %v1346 = vld [vmem:[%s320 + $0xa8] sm:$0xff]
        %v1347 = vld [vmem:[%s320 + $0xb0] sm:$0xff]
        %v1348 = vld [vmem:[%s320 + $0xb8] sm:$0xff]
        %v1349 = vld [vmem:[%s320 + $0xc0] sm:$0xff]
        %v1350 = vld [vmem:[%s320 + $0xc8] sm:$0xff]
        %v1351 = vld [vmem:[%s320 + $0xd0] sm:$0xff]
        %v1352 = vld [vmem:[%s320 + $0xd8] sm:$0xff]
        %v1353 = vld [vmem:[%s320 + $0xe0] sm:$0xff]
        %v1354 = vld [vmem:[%s320 + $0xe8] sm:$0xff]
        %v1355 = vld [vmem:[%s320 + $0xf0] sm:$0xff]
        %v1356 = vld [vmem:[%s320 + $0xf8] sm:$0xff]
        %v1389 = vunpack.c.l.b16 %v1325
        %v1390 = vunpack.c.h.b16 %v1325
        %v1391 = vunpack.c.l.b16 %v1326
        %v1392 = vunpack.c.h.b16 %v1326
        %v1393 = vunpack.c.l.b16 %v1327
        %v1394 = vunpack.c.h.b16 %v1327
        %v1395 = vunpack.c.l.b16 %v1328
        %v1396 = vunpack.c.h.b16 %v1328
        %v1397 = vunpack.c.l.b16 %v1329
        %v1398 = vunpack.c.h.b16 %v1329
        %v1399 = vunpack.c.l.b16 %v1330
        %v1400 = vunpack.c.h.b16 %v1330
        %v1401 = vunpack.c.l.b16 %v1331
        %v1402 = vunpack.c.h.b16 %v1331
        %v1403 = vunpack.c.l.b16 %v1332
        %v1404 = vunpack.c.h.b16 %v1332
        %v1405 = vunpack.c.l.b16 %v1333
        %v1406 = vunpack.c.h.b16 %v1333
        %v1407 = vunpack.c.l.b16 %v1334
        %v1408 = vunpack.c.h.b16 %v1334
        %v1409 = vunpack.c.l.b16 %v1335
        %v1410 = vunpack.c.h.b16 %v1335
        %v1411 = vunpack.c.l.b16 %v1336
        %v1412 = vunpack.c.h.b16 %v1336
        %v1413 = vunpack.c.l.b16 %v1337
        %v1414 = vunpack.c.h.b16 %v1337
        %v1415 = vunpack.c.l.b16 %v1338
        %v1416 = vunpack.c.h.b16 %v1338
        %v1417 = vunpack.c.l.b16 %v1339
        %v1418 = vunpack.c.h.b16 %v1339
        %v1419 = vunpack.c.l.b16 %v1340
        %v1420 = vunpack.c.h.b16 %v1340
        %v1421 = vunpack.c.l.b16 %v1341
        %v1422 = vunpack.c.h.b16 %v1341
        %v1423 = vunpack.c.l.b16 %v1342
        %v1424 = vunpack.c.h.b16 %v1342
        %v1425 = vunpack.c.l.b16 %v1343
        %v1426 = vunpack.c.h.b16 %v1343
        %v1427 = vunpack.c.l.b16 %v1344
        %v1428 = vunpack.c.h.b16 %v1344
        %v1429 = vunpack.c.l.b16 %v1345
        %v1430 = vunpack.c.h.b16 %v1345
        %v1431 = vunpack.c.l.b16 %v1346
        %v1432 = vunpack.c.h.b16 %v1346
        %v1433 = vunpack.c.l.b16 %v1347
        %v1434 = vunpack.c.h.b16 %v1347
        %v1435 = vunpack.c.l.b16 %v1348
        %v1436 = vunpack.c.h.b16 %v1348
        %v1437 = vunpack.c.l.b16 %v1349
        %v1438 = vunpack.c.h.b16 %v1349
        %v1439 = vunpack.c.l.b16 %v1350
        %v1440 = vunpack.c.h.b16 %v1350
        %v1441 = vunpack.c.l.b16 %v1351
        %v1442 = vunpack.c.h.b16 %v1351
        %v1443 = vunpack.c.l.b16 %v1352
        %v1444 = vunpack.c.h.b16 %v1352
        %v1445 = vunpack.c.l.b16 %v1353
        %v1446 = vunpack.c.h.b16 %v1353
        %v1447 = vunpack.c.l.b16 %v1354
        %v1448 = vunpack.c.h.b16 %v1354
        %v1449 = vunpack.c.l.b16 %v1355
        %v1450 = vunpack.c.h.b16 %v1355
        %v1451 = vunpack.c.l.b16 %v1356
        %v1452 = vunpack.c.h.b16 %v1356
        %v1453 = vpack.c.b16 %v1391, %v1389
        %v1454 = vpack.c.b16 %v1392, %v1390
        %v1455 = vpack.c.b16 %v1395, %v1393
        %v1456 = vpack.c.b16 %v1396, %v1394
        %v1457 = vpack.c.b16 %v1399, %v1397
        %v1458 = vpack.c.b16 %v1400, %v1398
        %v1459 = vpack.c.b16 %v1403, %v1401
        %v1460 = vpack.c.b16 %v1404, %v1402
        %v1461 = vpack.c.b16 %v1407, %v1405
        %v1462 = vpack.c.b16 %v1408, %v1406
        %v1463 = vpack.c.b16 %v1411, %v1409
        %v1464 = vpack.c.b16 %v1412, %v1410
        %v1465 = vpack.c.b16 %v1415, %v1413
        %v1466 = vpack.c.b16 %v1416, %v1414
        %v1467 = vpack.c.b16 %v1419, %v1417
        %v1468 = vpack.c.b16 %v1420, %v1418
        %v1469 = vpack.c.b16 %v1423, %v1421
        %v1470 = vpack.c.b16 %v1424, %v1422
        %v1471 = vpack.c.b16 %v1427, %v1425
        %v1472 = vpack.c.b16 %v1428, %v1426
        %v1473 = vpack.c.b16 %v1431, %v1429
        %v1474 = vpack.c.b16 %v1432, %v1430
        %v1475 = vpack.c.b16 %v1435, %v1433
        %v1476 = vpack.c.b16 %v1436, %v1434
        %v1477 = vpack.c.b16 %v1439, %v1437
        %v1478 = vpack.c.b16 %v1440, %v1438
        %v1479 = vpack.c.b16 %v1443, %v1441
        %v1480 = vpack.c.b16 %v1444, %v1442
        %v1481 = vpack.c.b16 %v1447, %v1445
        %v1482 = vpack.c.b16 %v1448, %v1446
        %v1483 = vpack.c.b16 %v1451, %v1449
        %v1484 = vpack.c.b16 %v1452, %v1450
        %1517 = vmatprep.subr.bf16.mxu0 %v1454
        %1518 = vmatpush1.bf16.msra.mxu0 %v1453
        %1519 = vmatprep.subr.bf16.mxu0 %v1456
        %1520 = vmatpush1.bf16.msra.mxu0 %v1455
        %1521 = vmatprep.subr.bf16.mxu0 %v1458
        %1522 = vmatpush1.bf16.msra.mxu0 %v1457
        %1523 = vmatprep.subr.bf16.mxu0 %v1460
        %1524 = vmatpush1.bf16.msra.mxu0 %v1459
        %1525 = vmatprep.subr.bf16.mxu0 %v1462
        %1526 = vmatpush1.bf16.msra.mxu0 %v1461
        %1527 = vmatprep.subr.bf16.mxu0 %v1464
        %1528 = vmatpush1.bf16.msra.mxu0 %v1463
        %1529 = vmatprep.subr.bf16.mxu0 %v1466
        %1530 = vmatpush1.bf16.msra.mxu0 %v1465
        %1531 = vmatprep.subr.bf16.mxu0 %v1468
        %1532 = vmatpush1.bf16.msra.mxu0 %v1467
        %1533 = vmatprep.subr.bf16.mxu0 %v1470
        %1534 = vmatpush1.bf16.msra.mxu0 %v1469
        %1535 = vmatprep.subr.bf16.mxu0 %v1472
        %1536 = vmatpush1.bf16.msra.mxu0 %v1471
        %1537 = vmatprep.subr.bf16.mxu0 %v1474
        %1538 = vmatpush1.bf16.msra.mxu0 %v1473
        %1539 = vmatprep.subr.bf16.mxu0 %v1476
        %1540 = vmatpush1.bf16.msra.mxu0 %v1475
        %1541 = vmatprep.subr.bf16.mxu0 %v1478
        %1542 = vmatpush1.bf16.msra.mxu0 %v1477
        %1543 = vmatprep.subr.bf16.mxu0 %v1480
        %1544 = vmatpush1.bf16.msra.mxu0 %v1479
        %1545 = vmatprep.subr.bf16.mxu0 %v1482
        %1546 = vmatpush1.bf16.msra.mxu0 %v1481
        %1547 = vmatprep.subr.bf16.mxu0 %v1484
        %1548 = vmatpush1.bf16.msra.mxu0 %v1483
        %1549 = vmatprep.mubr.bf16.mxu0 %v1310
        %1550 = vmatmul.mubr.bf16.gmra.mrb[0].mxu0 %v1309
        %v1551 = vpop.f32.mrb[0].mxu0
        %v1552 = vadd.f32 0.0, %v1551
        %v1553 = vpop.f32.mrb[0].mxu0
        %v1554 = vadd.f32 0.0, %v1553
        %v1555 = vpop.f32.mrb[0].mxu0
        %v1556 = vadd.f32 0.0, %v1555
        %v1557 = vpop.f32.mrb[0].mxu0
        %v1558 = vadd.f32 0.0, %v1557
        %1559 = vmatprep.mubr.bf16.mxu0 %v1312
        %1560 = vmatmul.mubr.bf16.gmra.mrb[0].mxu0 %v1311
        %v1561 = vpop.f32.mrb[0].mxu0
        %v1562 = vadd.f32 0.0, %v1561
        %v1563 = vpop.f32.mrb[0].mxu0
        %v1564 = vadd.f32 0.0, %v1563
        %v1565 = vpop.f32.mrb[0].mxu0
        %v1566 = vadd.f32 0.0, %v1565
        %v1567 = vpop.f32.mrb[0].mxu0
        %v1568 = vadd.f32 0.0, %v1567
        %1569 = vmatprep.mubr.bf16.mxu0 %v1314
        %1570 = vmatmul.mubr.bf16.gmra.mrb[0].mxu0 %v1313
        %v1571 = vpop.f32.mrb[0].mxu0
        %v1572 = vadd.f32 0.0, %v1571
        %v1573 = vpop.f32.mrb[0].mxu0
        %v1574 = vadd.f32 0.0, %v1573
        %v1575 = vpop.f32.mrb[0].mxu0
        %v1576 = vadd.f32 0.0, %v1575
        %v1577 = vpop.f32.mrb[0].mxu0
        %v1578 = vadd.f32 0.0, %v1577
        %1579 = vmatprep.mubr.bf16.mxu0 %v1316
        %1580 = vmatmul.mubr.bf16.gmra.mrb[0].mxu0 %v1315
        %v1581 = vpop.f32.mrb[0].mxu0
        %v1582 = vadd.f32 0.0, %v1581
        %v1583 = vpop.f32.mrb[0].mxu0
        %v1584 = vadd.f32 0.0, %v1583
        %v1585 = vpop.f32.mrb[0].mxu0
        %v1586 = vadd.f32 0.0, %v1585
        %v1587 = vpop.f32.mrb[0].mxu0
        %v1588 = vadd.f32 0.0, %v1587
        %1589 = vmatprep.mubr.bf16.mxu0 %v1318
        %1590 = vmatmul.mubr.bf16.gmra.mrb[0].mxu0 %v1317
        %v1591 = vpop.f32.mrb[0].mxu0
        %v1592 = vadd.f32 0.0, %v1591
        %v1593 = vpop.f32.mrb[0].mxu0
        %v1594 = vadd.f32 0.0, %v1593
        %v1595 = vpop.f32.mrb[0].mxu0
        %v1596 = vadd.f32 0.0, %v1595
        %v1597 = vpop.f32.mrb[0].mxu0
        %v1598 = vadd.f32 0.0, %v1597
        %1599 = vmatprep.mubr.bf16.mxu0 %v1320
        %1600 = vmatmul.mubr.bf16.gmra.mrb[0].mxu0 %v1319
        %v1601 = vpop.f32.mrb[0].mxu0
        %v1602 = vadd.f32 0.0, %v1601
        %v1603 = vpop.f32.mrb[0].mxu0
        %v1604 = vadd.f32 0.0, %v1603
        %v1605 = vpop.f32.mrb[0].mxu0
        %v1606 = vadd.f32 0.0, %v1605
        %v1607 = vpop.f32.mrb[0].mxu0
        %v1608 = vadd.f32 0.0, %v1607
        %1609 = vmatprep.mubr.bf16.mxu0 %v1322
        %1610 = vmatmul.mubr.bf16.gmra.mrb[0].mxu0 %v1321
        %v1611 = vpop.f32.mrb[0].mxu0
        %v1612 = vadd.f32 0.0, %v1611
        %v1613 = vpop.f32.mrb[0].mxu0
        %v1614 = vadd.f32 0.0, %v1613
        %v1615 = vpop.f32.mrb[0].mxu0
        %v1616 = vadd.f32 0.0, %v1615
        %v1617 = vpop.f32.mrb[0].mxu0
        %v1618 = vadd.f32 0.0, %v1617
        %1619 = vmatprep.mubr.bf16.mxu0 %v1324
        %1620 = vmatmul.mubr.bf16.gmra.mrb[0].mxu0 %v1323
        %v1621 = vpop.f32.mrb[0].mxu0
        %v1622 = vadd.f32 0.0, %v1621
        %v1623 = vpop.f32.mrb[0].mxu0
        %v1624 = vadd.f32 0.0, %v1623
        %v1625 = vpop.f32.mrb[0].mxu0
        %v1626 = vadd.f32 0.0, %v1625
        %v1627 = vpop.f32.mrb[0].mxu0
        %v1628 = vadd.f32 0.0, %v1627
        %1629 = vdwg.mxu0
        %v1630 = vadd.f32 %v1273, %v1552
        %v1631 = vadd.f32 %v1274, %v1554
        %v1632 = vadd.f32 %v1275, %v1556
        %v1633 = vadd.f32 %v1276, %v1558
        %v1634 = vadd.f32 %v1277, %v1562
        %v1635 = vadd.f32 %v1278, %v1564
        %v1636 = vadd.f32 %v1279, %v1566
        %v1637 = vadd.f32 %v1280, %v1568
        %v1638 = vadd.f32 %v1281, %v1572
        %v1639 = vadd.f32 %v1282, %v1574
        %v1640 = vadd.f32 %v1283, %v1576
        %v1641 = vadd.f32 %v1284, %v1578
        %v1642 = vadd.f32 %v1285, %v1582
        %v1643 = vadd.f32 %v1286, %v1584
        %v1644 = vadd.f32 %v1287, %v1586
        %v1645 = vadd.f32 %v1288, %v1588
        %v1646 = vadd.f32 %v1289, %v1592
        %v1647 = vadd.f32 %v1290, %v1594
        %v1648 = vadd.f32 %v1291, %v1596
        %v1649 = vadd.f32 %v1292, %v1598
        %v1650 = vadd.f32 %v1293, %v1602
        %v1651 = vadd.f32 %v1294, %v1604
        %v1652 = vadd.f32 %v1295, %v1606
        %v1653 = vadd.f32 %v1296, %v1608
        %v1654 = vadd.f32 %v1297, %v1612
        %v1655 = vadd.f32 %v1298, %v1614
        %v1656 = vadd.f32 %v1299, %v1616
        %v1657 = vadd.f32 %v1300, %v1618
        %v1658 = vadd.f32 %v1301, %v1622
        %v1659 = vadd.f32 %v1302, %v1624
        %v1660 = vadd.f32 %v1303, %v1626
        %v1661 = vadd.f32 %v1304, %v1628
        %1662 = vst [vmem:[#allocation5] sm:$0xff] %v1630
        %1663 = vst [vmem:[#allocation5 + $0x8] sm:$0xff] %v1631
        %1664 = vst [vmem:[#allocation5 + $0x10] sm:$0xff] %v1632
        %1665 = vst [vmem:[#allocation5 + $0x18] sm:$0xff] %v1633
        %1666 = vst [vmem:[#allocation5 + $0x20] sm:$0xff] %v1634
        %1667 = vst [vmem:[#allocation5 + $0x28] sm:$0xff] %v1635
        %1668 = vst [vmem:[#allocation5 + $0x30] sm:$0xff] %v1636
        %1669 = vst [vmem:[#allocation5 + $0x38] sm:$0xff] %v1637
        %1670 = vst [vmem:[#allocation5 + $0x40] sm:$0xff] %v1638
        %1671 = vst [vmem:[#allocation5 + $0x48] sm:$0xff] %v1639
        %1672 = vst [vmem:[#allocation5 + $0x50] sm:$0xff] %v1640
        %1673 = vst [vmem:[#allocation5 + $0x58] sm:$0xff] %v1641
        %1674 = vst [vmem:[#allocation5 + $0x60] sm:$0xff] %v1642
        %1675 = vst [vmem:[#allocation5 + $0x68] sm:$0xff] %v1643
        %1676 = vst [vmem:[#allocation5 + $0x70] sm:$0xff] %v1644
        %1677 = vst [vmem:[#allocation5 + $0x78] sm:$0xff] %v1645
        %1678 = vst [vmem:[#allocation5 + $0x80] sm:$0xff] %v1646
        %1679 = vst [vmem:[#allocation5 + $0x88] sm:$0xff] %v1647
        %1680 = vst [vmem:[#allocation5 + $0x90] sm:$0xff] %v1648
        %1681 = vst [vmem:[#allocation5 + $0x98] sm:$0xff] %v1649
        %1682 = vst [vmem:[#allocation5 + $0xa0] sm:$0xff] %v1650
        %1683 = vst [vmem:[#allocation5 + $0xa8] sm:$0xff] %v1651
        %1684 = vst [vmem:[#allocation5 + $0xb0] sm:$0xff] %v1652
        %1685 = vst [vmem:[#allocation5 + $0xb8] sm:$0xff] %v1653
        %1686 = vst [vmem:[#allocation5 + $0xc0] sm:$0xff] %v1654
        %1687 = vst [vmem:[#allocation5 + $0xc8] sm:$0xff] %v1655
        %1688 = vst [vmem:[#allocation5 + $0xd0] sm:$0xff] %v1656
        %1689 = vst [vmem:[#allocation5 + $0xd8] sm:$0xff] %v1657
        %1690 = vst [vmem:[#allocation5 + $0xe0] sm:$0xff] %v1658
        %1691 = vst [vmem:[#allocation5 + $0xe8] sm:$0xff] %v1659
        %1692 = vst [vmem:[#allocation5 + $0xf0] sm:$0xff] %v1660
        %1693 = vst [vmem:[#allocation5 + $0xf8] sm:$0xff] %v1661
        %p1694 = scmp.eq.s32.totalorder %s30, 1
        // Predicated region
        $region65: #{tpu_custom_call.1} parent=39 // pred_check
          %p1695 = pneg %p1694
        $region66: #{tpu_custom_call.1} parent=39 // pred_check_branch
          %1697 = sbr.rel (%p1695) target = $region68
        $region67: #{tpu_custom_call.1} parent=39 // pred_region
          %v1698 = vld [vmem:[#allocation5] sm:$0xff]
          %v1699 = vld [vmem:[#allocation5 + $0x8] sm:$0xff]
          %v1700 = vld [vmem:[#allocation5 + $0x10] sm:$0xff]
          %v1701 = vld [vmem:[#allocation5 + $0x18] sm:$0xff]
          %v1702 = vld [vmem:[#allocation5 + $0x20] sm:$0xff]
          %v1703 = vld [vmem:[#allocation5 + $0x28] sm:$0xff]
          %v1704 = vld [vmem:[#allocation5 + $0x30] sm:$0xff]
          %v1705 = vld [vmem:[#allocation5 + $0x38] sm:$0xff]
          %v1706 = vld [vmem:[#allocation5 + $0x40] sm:$0xff]
          %v1707 = vld [vmem:[#allocation5 + $0x48] sm:$0xff]
          %v1708 = vld [vmem:[#allocation5 + $0x50] sm:$0xff]
          %v1709 = vld [vmem:[#allocation5 + $0x58] sm:$0xff]
          %v1710 = vld [vmem:[#allocation5 + $0x60] sm:$0xff]
          %v1711 = vld [vmem:[#allocation5 + $0x68] sm:$0xff]
          %v1712 = vld [vmem:[#allocation5 + $0x70] sm:$0xff]
          %v1713 = vld [vmem:[#allocation5 + $0x78] sm:$0xff]
          %v1714 = vld [vmem:[#allocation5 + $0x80] sm:$0xff]
          %v1715 = vld [vmem:[#allocation5 + $0x88] sm:$0xff]
          %v1716 = vld [vmem:[#allocation5 + $0x90] sm:$0xff]
          %v1717 = vld [vmem:[#allocation5 + $0x98] sm:$0xff]
          %v1718 = vld [vmem:[#allocation5 + $0xa0] sm:$0xff]
          %v1719 = vld [vmem:[#allocation5 + $0xa8] sm:$0xff]
          %v1720 = vld [vmem:[#allocation5 + $0xb0] sm:$0xff]
          %v1721 = vld [vmem:[#allocation5 + $0xb8] sm:$0xff]
          %v1722 = vld [vmem:[#allocation5 + $0xc0] sm:$0xff]
          %v1723 = vld [vmem:[#allocation5 + $0xc8] sm:$0xff]
          %v1724 = vld [vmem:[#allocation5 + $0xd0] sm:$0xff]
          %v1725 = vld [vmem:[#allocation5 + $0xd8] sm:$0xff]
          %v1726 = vld [vmem:[#allocation5 + $0xe0] sm:$0xff]
          %v1727 = vld [vmem:[#allocation5 + $0xe8] sm:$0xff]
          %v1728 = vld [vmem:[#allocation5 + $0xf0] sm:$0xff]
          %v1729 = vld [vmem:[#allocation5 + $0xf8] sm:$0xff]
          %v1730 = vld [vmem:[%s379] sm:$0x3]
          %v1732 = vlaneseq
          %v1733 = vshrl.u32 %v1732, 7
          %v1734 = vsub.s32 0, %v1733
          %v1735 = vrot.slane %v1730, %v1734
          %v1736 = vlaneseq
          %v1737 = vshrl.u32 %v1736, 7
          %v1738 = vsub.s32 1, %v1737
          %v1739 = vrot.slane %v1730, %v1738
          %v1742 = vadd.f32 %v1698, %v1735
          %v1743 = vadd.f32 %v1699, %v1739
          %v1744 = vadd.f32 %v1700, %v1735
          %v1745 = vadd.f32 %v1701, %v1739
          %v1746 = vadd.f32 %v1702, %v1735
          %v1747 = vadd.f32 %v1703, %v1739
          %v1748 = vadd.f32 %v1704, %v1735
          %v1749 = vadd.f32 %v1705, %v1739
          %v1750 = vadd.f32 %v1706, %v1735
          %v1751 = vadd.f32 %v1707, %v1739
          %v1752 = vadd.f32 %v1708, %v1735
          %v1753 = vadd.f32 %v1709, %v1739
          %v1754 = vadd.f32 %v1710, %v1735
          %v1755 = vadd.f32 %v1711, %v1739
          %v1756 = vadd.f32 %v1712, %v1735
          %v1757 = vadd.f32 %v1713, %v1739
          %v1758 = vadd.f32 %v1714, %v1735
          %v1759 = vadd.f32 %v1715, %v1739
          %v1760 = vadd.f32 %v1716, %v1735
          %v1761 = vadd.f32 %v1717, %v1739
          %v1762 = vadd.f32 %v1718, %v1735
          %v1763 = vadd.f32 %v1719, %v1739
          %v1764 = vadd.f32 %v1720, %v1735
          %v1765 = vadd.f32 %v1721, %v1739
          %v1766 = vadd.f32 %v1722, %v1735
          %v1767 = vadd.f32 %v1723, %v1739
          %v1768 = vadd.f32 %v1724, %v1735
          %v1769 = vadd.f32 %v1725, %v1739
          %v1770 = vadd.f32 %v1726, %v1735
          %v1771 = vadd.f32 %v1727, %v1739
          %v1772 = vadd.f32 %v1728, %v1735
          %v1773 = vadd.f32 %v1729, %v1739
          %1774 = vst [vmem:[%s359] sm:$0xff] %v1742
          %1775 = vst [vmem:[%s359 + $0x8] sm:$0xff] %v1743
          %1776 = vst [vmem:[%s359 + $0x10] sm:$0xff] %v1744
          %1777 = vst [vmem:[%s359 + $0x18] sm:$0xff] %v1745
          %1778 = vst [vmem:[%s359 + $0x20] sm:$0xff] %v1746
          %1779 = vst [vmem:[%s359 + $0x28] sm:$0xff] %v1747
          %1780 = vst [vmem:[%s359 + $0x30] sm:$0xff] %v1748
          %1781 = vst [vmem:[%s359 + $0x38] sm:$0xff] %v1749
          %1782 = vst [vmem:[%s359 + $0x40] sm:$0xff] %v1750
          %1783 = vst [vmem:[%s359 + $0x48] sm:$0xff] %v1751
          %1784 = vst [vmem:[%s359 + $0x50] sm:$0xff] %v1752
          %1785 = vst [vmem:[%s359 + $0x58] sm:$0xff] %v1753
          %1786 = vst [vmem:[%s359 + $0x60] sm:$0xff] %v1754
          %1787 = vst [vmem:[%s359 + $0x68] sm:$0xff] %v1755
          %1788 = vst [vmem:[%s359 + $0x70] sm:$0xff] %v1756
          %1789 = vst [vmem:[%s359 + $0x78] sm:$0xff] %v1757
          %1790 = vst [vmem:[%s359 + $0x80] sm:$0xff] %v1758
          %1791 = vst [vmem:[%s359 + $0x88] sm:$0xff] %v1759
          %1792 = vst [vmem:[%s359 + $0x90] sm:$0xff] %v1760
          %1793 = vst [vmem:[%s359 + $0x98] sm:$0xff] %v1761
          %1794 = vst [vmem:[%s359 + $0xa0] sm:$0xff] %v1762
          %1795 = vst [vmem:[%s359 + $0xa8] sm:$0xff] %v1763
          %1796 = vst [vmem:[%s359 + $0xb0] sm:$0xff] %v1764
          %1797 = vst [vmem:[%s359 + $0xb8] sm:$0xff] %v1765
          %1798 = vst [vmem:[%s359 + $0xc0] sm:$0xff] %v1766
          %1799 = vst [vmem:[%s359 + $0xc8] sm:$0xff] %v1767
          %1800 = vst [vmem:[%s359 + $0xd0] sm:$0xff] %v1768
          %1801 = vst [vmem:[%s359 + $0xd8] sm:$0xff] %v1769
          %1802 = vst [vmem:[%s359 + $0xe0] sm:$0xff] %v1770
          %1803 = vst [vmem:[%s359 + $0xe8] sm:$0xff] %v1771
          %1804 = vst [vmem:[%s359 + $0xf0] sm:$0xff] %v1772
          %1805 = vst [vmem:[%s359 + $0xf8] sm:$0xff] %v1773
        $region68: #{tpu_custom_call.1} parent=39 // pred_fallthru
          _
        %s1806 = sand.u32 %s174, 1
        %s1807 = scalar_lea.sflag [#allocation8], %s1806
        %s1808 = sand.u32 %s174, 1
        %s1809 = smul.addr %s1808, 256
        %s1810 = scalar_lea.vmem [#allocation12], %s1809
        // Predicated region
        $region69: #{tpu_custom_call.1} parent=39 // pred_check
          %p1811 = pneg %p184
        $region70: #{tpu_custom_call.1} parent=39 // pred_check_branch
          %1813 = sbr.rel (%p1811) target = $region72
        $region71: #{tpu_custom_call.1} parent=39 // pred_region
          %s1814 = smul.u32 16, %s28
          %s1815 = smul.u32 2, %s29
          %s1816 = ssub.s32 25, %s1814
          %p1817 = scmp.lt.s32.totalorder %s1816, 16
          %s1818 = scalar_select %p1817, %s1816, 16
          %s1819 = smul.u32 128, %s1818
          %s1820 = ssub.s32 5, %s1815
          %p1821 = scmp.lt.s32.totalorder %s1820, 2
          %s1822 = scalar_select %p1821, %s1820, 2
          %s1823 = smul.u32 %s1819, %s1822
          %s1825 = ssub.s32 4096, %s1823
          %1826 = vsyncadd %s1807, %s1825
          %p1827 = scmp.ne.s32.totalorder 0, %s1823
          %s1828 = smul.addr %s1814, 5
          %s1829 = sadd.s32 %s1815, %s1828
          %s1830 = smul.addr %s1829, 128
          %s1831 = scalar_lea.hbm %s5, %s1830
          %s1832 = smul.u32 %s1822, 8
          %s1833 = smul.u32 %s1832, %s1818
          %s1834 = sshll.u32 %s1810, 4
          %s1835 = int_to_ptr.vmem [resolvable:$true] %s1834
          %s1836 = sshll.u32 %s1833, 4
          %1840 = dma.vmem_to_hbm [thread:$0]  (%p1827), %s1835, %s1836, %s1831, %s1807, 256, 640, %s1832
        $region72: #{tpu_custom_call.1} parent=39 // pred_fallthru
          _
      $region40: #{tpu_custom_call.1} parent=5 // pred_fallthru
        _
      %p1841 = scmp.le.s32.totalorder 2, %s18
      // Predicated region
      $region73: #{tpu_custom_call.1} parent=5 // pred_check
        %p1842 = pneg %p1841
      $region74: #{tpu_custom_call.1} parent=5 // pred_check_branch
        %1844 = sbr.rel (%p1842) target = $region76
      $region75: #{tpu_custom_call.1} parent=5 // pred_region
        %s1845 = ssub.s32 %s18, 2
        // Predicated region
        $region77: #{tpu_custom_call.1} parent=75 // pred_check
          %p1846 = pneg %p190
        $region78: #{tpu_custom_call.1} parent=75 // pred_check_branch
          %1848 = sbr.rel (%p1846) target = $region80
        $region79: #{tpu_custom_call.1} parent=75 // pred_region
          %s1849 = sand.u32 %s175, 1
          %s1850 = scalar_lea.sflag [#allocation8], %s1849
          %s1851 = sand.u32 %s175, 1
          %s1852 = smul.addr %s1851, 256
          %s1853 = scalar_lea.vmem [#allocation12], %s1852
          %1854 = dma.done %s1850, 4096
        $region80: #{tpu_custom_call.1} parent=75 // pred_fallthru
          _
      $region76: #{tpu_custom_call.1} parent=5 // pred_fallthru
        _
    $region6: #{tpu_custom_call.1} parent=1 // loop_footer
      %s22 = sadd.s32 1, %s18
    $region7: #{tpu_custom_call.1} parent=1 // loop_footer_branch
      %17 = sbr.rel target = $region3
    $region8: #{tpu_custom_call.1} parent=1 // loop_exit
      _
    %1855 = vsyncpa [#allocation7], 1
    %s1856 = scalar_lea.sflag [#allocation7], 1
    %1857 = vsyncpa %s1856, 1
    %1858 = vsyncpa [#allocation10], 1
    %1859 = vsyncpa [#allocation8], 1
    %s1860 = scalar_lea.sflag [#allocation8], 1
    %1861 = vsyncpa %s1860, 1

</llo_original>
